<compile_context>
chip_gen: v7x
topology: tpu7x:2x2x1
jax: 0.10.0
libtpu: 0.0.40
codegen_flags: <defaults>
</compile_context>

<pallas_src>
import jax
import jax.numpy as jnp
from jax.experimental import pallas as pl
from jax.experimental.pallas import tpu as pltpu

# Module hyper-parameters (small, consistent with ShapeNN.__init__)
N_HIDDEN_LAYERS = 2
WIDTH = 32
BN_EPS = 1e-5
LANE = 128
TP_DEFAULT = 8          # nets fused per grid step: TP * WIDTH = 256 (MXU width)
MAX_LANE_TILE = 1024    # lane (batch) tile upper bound


# ----------------------------------------------------------------------------
# Kernel
# ----------------------------------------------------------------------------
def _make_kernel(n_hidden):
    """Per-(group, lane-tile) kernel. All shapes are static at trace time."""

    def kernel(x_ref, w1_ref, b1_ref, wh_ref, bh_ref, wo_ref, bo_ref, o_ref):
        # x_ref:  (TP, TN)       per-net rows, batch on lanes (BN already folded
        #                        into w1/b1 by the wrapper; padded lanes are junk
        #                        that gets sliced off outside).
        # w1_ref: (1, BW, TP)    block-diagonal folded input weights (BW = TP*W)
        # b1_ref: (1, BW, 1)
        # wh_ref: (1, H, BW, BW) block-diagonal hidden weights
        # bh_ref: (1, H, BW, 1)
        # wo_ref: (1, TP, BW)    block output weights
        # bo_ref: (1, TP, 1)
        # o_ref:  (TP, TN)       lane-dense output slab
        x = x_ref[...]

        # Input layer Linear(1, W) (+ folded BatchNorm) for TP nets at once:
        # (BW, TP) @ (TP, TN) -> (BW, TN), then bias + ReLU.
        h = jnp.dot(w1_ref[0], x, preferred_element_type=jnp.float32) + b1_ref[0]
        h = jnp.maximum(h, 0.0)

        # Hidden layers: one block-diagonal (BW, BW) @ (BW, TN) MXU pass each.
        for k in range(n_hidden):
            h = jnp.dot(wh_ref[0, k], h,
                        preferred_element_type=jnp.float32) + bh_ref[0, k]
            h = jnp.maximum(h, 0.0)

        # Output layer Linear(W, 1) for TP nets: (TP, BW) @ (BW, TN) -> (TP, TN).
        o_ref[...] = (jnp.dot(wo_ref[0], h,
                              preferred_element_type=jnp.float32) + bo_ref[0])

    return kernel


# ----------------------------------------------------------------------------
# Parameters (torch-default Linear init), raw per-net layout
# ----------------------------------------------------------------------------
def init_params(key, p_nets, *, width=WIDTH, n_hidden=N_HIDDEN_LAYERS):
    ks = jax.random.split(key, 4 + 2 * n_hidden)
    u = lambda k, shape, bound: jax.random.uniform(
        k, shape, jnp.float32, -bound, bound)

    bn_gamma = jnp.ones((p_nets,), jnp.float32)     # BatchNorm1d(1) init
    bn_beta = jnp.zeros((p_nets,), jnp.float32)

    # input Linear(1, width): bound = 1/sqrt(1)
    w1 = u(ks[0], (p_nets, width, 1), 1.0)
    b1 = u(ks[1], (p_nets, width, 1), 1.0)

    bound = 1.0 / float(width) ** 0.5
    wh = jnp.stack([u(ks[2 + 2 * i], (p_nets, width, width), bound)
                    for i in range(n_hidden)], axis=1)          # (P, H, W, W)
    bh = jnp.stack([u(ks[3 + 2 * i], (p_nets, width, 1), bound)
                    for i in range(n_hidden)], axis=1)          # (P, H, W, 1)
    wo = u(ks[2 + 2 * n_hidden], (p_nets, 1, width), bound)     # (P, 1, W)
    bo = u(ks[3 + 2 * n_hidden], (p_nets, 1), bound)            # (P, 1)

    return dict(bn_gamma=bn_gamma, bn_beta=bn_beta, w1=w1, b1=b1,
                wh=wh, bh=bh, wo=wo, bo=bo)


# ----------------------------------------------------------------------------
# Host-side packing: TP nets per group, block-diagonal weights (explicit zeros)
# ----------------------------------------------------------------------------
def pack_params(params, *, tp=TP_DEFAULT, width=WIDTH, n_hidden=N_HIDDEN_LAYERS):
    p_true = params["w1"].shape[0]
    p_pad = ((p_true + tp - 1) // tp) * tp
    g = p_pad // tp
    bw = tp * width

    def pad_nets(a):
        return jnp.pad(a, [(0, p_pad - p_true)] + [(0, 0)] * (a.ndim - 1))

    w1 = pad_nets(params["w1"][..., 0])            # (Pp, W)
    b1 = pad_nets(params["b1"][..., 0])            # (Pp, W)
    gamma = pad_nets(params["bn_gamma"])           # (Pp,)
    beta = pad_nets(params["bn_beta"])             # (Pp,)

    eye = jnp.eye(tp, dtype=jnp.float32)

    # Hidden layers -> (G, H, BW, BW) block-diagonal, zeros off-diagonal.
    whg = pad_nets(params["wh"]).reshape(g, tp, n_hidden, width, width)
    wh_big = jnp.einsum("gthab,ts->ghtasb", whg, eye).reshape(g, n_hidden, bw, bw)
    bh_big = pad_nets(params["bh"])[..., 0].reshape(g, tp, n_hidden, width)
    bh_big = bh_big.transpose(0, 2, 1, 3).reshape(g, n_hidden, bw, 1)

    # Output layer -> (G, TP, BW) block structure.
    wog = pad_nets(params["wo"])[:, 0, :].reshape(g, tp, width)
    wo_big = jnp.einsum("gtw,ts->gtsw", wog, eye).reshape(g, tp, bw)
    bo_big = pad_nets(params["bo"]).reshape(g, tp, 1)

    return dict(p_true=p_true, p_pad=p_pad, tp=tp, width=width,
                n_hidden=n_hidden,
                bn_gamma=gamma, bn_beta=beta, w1=w1, b1=b1,
                wh_big=wh_big, bh_big=bh_big, wo_big=wo_big, bo_big=bo_big)


# ----------------------------------------------------------------------------
# Forward: P independent ShapeNNs in one gridded pallas_call.  x: (P, N) -> (P, N)
# ----------------------------------------------------------------------------
def shape_nn_forward_many(x, packed, *, max_lane_tile=MAX_LANE_TILE):
    x = jnp.asarray(x, jnp.float32)
    p_nets, n = x.shape
    tp = packed["tp"]
    width = packed["width"]
    n_hidden = packed["n_hidden"]
    p_pad = packed["p_pad"]
    assert p_nets <= packed["p_true"] or p_nets <= p_pad, "pack more nets"
    g = p_pad // tp
    bw = tp * width

    # Lane (batch) padding + tiling: x is zero-padded to a lane-tile multiple;
    # padded-lane outputs are sliced off below (BN stats use the true x only).
    n128 = max(LANE, ((n + LANE - 1) // LANE) * LANE)
    tn = n128 if n128 <= max_lane_tile else max_lane_tile
    n_pad = ((n128 + tn - 1) // tn) * tn
    n_tiles = n_pad // tn
    x_pad = jnp.zeros((p_pad, n_pad), jnp.float32).at[:p_nets, :n].set(x)

    # BatchNorm1d(1) training-mode statistics (biased variance), computed with
    # plain XLA reductions and folded into the input-layer weight/bias.
    mean = jnp.mean(x, axis=1)                                       # (P,)
    var = jnp.mean((x - mean[:, None]) ** 2, axis=1)                 # (P,)
    mean = jnp.zeros((p_pad,), jnp.float32).at[:p_nets].set(mean)
    var = jnp.zeros((p_pad,), jnp.float32).at[:p_nets].set(var)
    scale = packed["bn_gamma"] / jnp.sqrt(var + BN_EPS)              # (Pp,)
    shift = packed["bn_beta"] - mean * scale                         # (Pp,)
    w1_eff = packed["w1"] * scale[:, None]                           # (Pp, W)
    b1_eff = packed["b1"] + packed["w1"] * shift[:, None]            # (Pp, W)

    eye = jnp.eye(tp, dtype=jnp.float32)
    w1_big = jnp.einsum("gtw,ts->gtws",
                        w1_eff.reshape(g, tp, width), eye).reshape(g, bw, tp)
    b1_big = b1_eff.reshape(g, bw, 1)

    kernel = _make_kernel(n_hidden)

    flops = int(g * n_tiles * 2 * tn * (bw * tp + n_hidden * bw * bw + tp * bw))
    bytes_accessed = 4 * int(
        x_pad.size + p_pad * n_pad + w1_big.size + b1_big.size
        + packed["wh_big"].size + packed["bh_big"].size
        + packed["wo_big"].size + packed["bo_big"].size)

    out = pl.pallas_call(
        kernel,
        out_shape=jax.ShapeDtypeStruct((p_pad, n_pad), jnp.float32),
        grid=(g, n_tiles),
        in_specs=[
            pl.BlockSpec((tp, tn), lambda gi, j: (gi, j)),                        # x
            pl.BlockSpec((1, bw, tp), lambda gi, j: (gi, 0, 0)),                  # w1
            pl.BlockSpec((1, bw, 1), lambda gi, j: (gi, 0, 0)),                   # b1
            pl.BlockSpec((1, n_hidden, bw, bw), lambda gi, j: (gi, 0, 0, 0)),     # wh
            pl.BlockSpec((1, n_hidden, bw, 1), lambda gi, j: (gi, 0, 0, 0)),      # bh
            pl.BlockSpec((1, tp, bw), lambda gi, j: (gi, 0, 0)),                  # wo
            pl.BlockSpec((1, tp, 1), lambda gi, j: (gi, 0, 0)),                   # bo
        ],
        out_specs=pl.BlockSpec((tp, tn), lambda gi, j: (gi, j)),
        compiler_params=pltpu.CompilerParams(
            dimension_semantics=("parallel", "parallel")),
        cost_estimate=pl.CostEstimate(
            flops=flops, transcendentals=0, bytes_accessed=bytes_accessed),
    )(x_pad, w1_big, b1_big, packed["wh_big"], packed["bh_big"],
      packed["wo_big"], packed["bo_big"])

    return out[:p_nets, :n]


def shape_nn_forward(x, packed):
    """Torch-shaped single-network call: x (N,) -> (N, 1) (matches x.unsqueeze(1))."""
    out = shape_nn_forward_many(jnp.asarray(x, jnp.float32)[None, :], packed)
    return out[0][:, None]


# ----------------------------------------------------------------------------
# Pure-JAX reference (un-folded math) for a sanity check
# ----------------------------------------------------------------------------
def shape_nn_reference(x, params, *, n_hidden=N_HIDDEN_LAYERS):
    x = jnp.asarray(x, jnp.float32)
    outs = []
    for p in range(x.shape[0]):
        xp = x[p]
        mean = jnp.mean(xp)
        var = jnp.mean((xp - mean) ** 2)
        xn = ((xp - mean) / jnp.sqrt(var + BN_EPS)
              * params["bn_gamma"][p] + params["bn_beta"][p])
        h = jnp.maximum(params["w1"][p] * xn[None, :] + params["b1"][p], 0.0)
        for k in range(n_hidden):
            h = jnp.maximum(params["wh"][p, k] @ h + params["bh"][p, k], 0.0)
        outs.append((params["wo"][p] @ h + params["bo"][p][:, None])[0])
    return jnp.stack(outs)


if __name__ == "__main__":
    key = jax.random.PRNGKey(0)
    k_x, k_p, k_p1 = jax.random.split(key, 3)

    # 8 independent ShapeNNs (one full TP=8 group), batch 200 (non-multiple of
    # 128 exercises the lane padding path).
    P, N = 8, 200
    x = jax.random.normal(k_x, (P, N), jnp.float32)
    params = init_params(k_p, P)
    packed = pack_params(params)

    out = jax.block_until_ready(shape_nn_forward_many(x, packed))
    ref = shape_nn_reference(x, params)
    assert out.shape == (P, N)
    assert jnp.allclose(out, ref, atol=1e-4, rtol=1e-4), "mismatch vs reference"

    # Torch-shaped single-network call: (N,) -> (N, 1); P=1 is padded to TP=8.
    params1 = init_params(k_p1, 1)
    packed1 = pack_params(params1)
    out1 = jax.block_until_ready(shape_nn_forward(x[0], packed1))
    ref1 = shape_nn_reference(x[:1], params1)[0][:, None]
    assert out1.shape == (N, 1)
    assert jnp.allclose(out1, ref1, atol=1e-4, rtol=1e-4), "mismatch vs reference (P=1)"

    print("KERNEL_OK")
</pallas_src>

<mosaic_0001>
module attributes {stable_mosaic.version = 11 : i64} {
  func.func @kernel(%arg0: i32, %arg1: i32, %arg2: memref<8x256xf32, #tpu.memory_space<vmem>>, %arg3: memref<1x256x8xf32, #tpu.memory_space<vmem>>, %arg4: memref<1x256x1xf32, #tpu.memory_space<vmem>>, %arg5: memref<1x2x256x256xf32, #tpu.memory_space<vmem>>, %arg6: memref<1x2x256x1xf32, #tpu.memory_space<vmem>>, %arg7: memref<1x8x256xf32, #tpu.memory_space<vmem>>, %arg8: memref<1x8x1xf32, #tpu.memory_space<vmem>>, %arg9: memref<8x256xf32, #tpu.memory_space<vmem>>) attributes {dimension_semantics = [#tpu.dimension_semantics<parallel>, #tpu.dimension_semantics<parallel>], iteration_bounds = array<i64: 1, 1>, scalar_prefetch = 0 : i64, scratch_operands = 0 : i64, tpu.core_type = #tpu.core_type<tc>, window_params = [{transform_indices = @transform_0, window_bounds = array<i64: 8, 256>}, {transform_indices = @transform_1, window_bounds = array<i64: 1, 256, 8>}, {transform_indices = @transform_2, window_bounds = array<i64: 1, 256, 1>}, {transform_indices = @transform_3, window_bounds = array<i64: 1, 2, 256, 256>}, {transform_indices = @transform_4, window_bounds = array<i64: 1, 2, 256, 1>}, {transform_indices = @transform_5, window_bounds = array<i64: 1, 8, 256>}, {transform_indices = @transform_6, window_bounds = array<i64: 1, 8, 1>}, {transform_indices = @transform_7, window_bounds = array<i64: 8, 256>}]} {
    %c0 = arith.constant 0 : index
    %c0_0 = arith.constant 0 : index
    %0 = vector.load %arg2[%c0, %c0_0] : memref<8x256xf32, #tpu.memory_space<vmem>>, vector<8x256xf32>
    %c0_1 = arith.constant 0 : index
    %c0_2 = arith.constant 0 : index
    %c0_3 = arith.constant 0 : index
    %1 = vector.load %arg3[%c0_1, %c0_2, %c0_3] : memref<1x256x8xf32, #tpu.memory_space<vmem>>, vector<1x256x8xf32>
    %2 = vector.shape_cast %1 : vector<1x256x8xf32> to vector<256x8xf32>
    %cst = arith.constant dense<0.000000e+00> : vector<256x256xf32>
    %3 = tpu.matmul %2, %0, %cst {dimension_numbers = #tpu.dot_dimension_numbers<[1], [0], [0], [1], [0, 0, 1, 1], [], []>} : vector<256x8xf32>, vector<8x256xf32>, vector<256x256xf32> -> vector<256x256xf32>
    %c0_4 = arith.constant 0 : index
    %c0_5 = arith.constant 0 : index
    %c0_6 = arith.constant 0 : index
    %4 = vector.load %arg4[%c0_4, %c0_5, %c0_6] : memref<1x256x1xf32, #tpu.memory_space<vmem>>, vector<1x256x1xf32>
    %5 = vector.shape_cast %4 : vector<1x256x1xf32> to vector<256x1xf32>
    %6 = vector.broadcast %5 : vector<256x1xf32> to vector<256x256xf32>
    %7 = arith.addf %3, %6 : vector<256x256xf32>
    %cst_7 = arith.constant 0.000000e+00 : f32
    %8 = vector.broadcast %cst_7 : f32 to vector<256x256xf32>
    %9 = arith.maximumf %7, %8 : vector<256x256xf32>
    %c0_8 = arith.constant 0 : index
    %c0_9 = arith.constant 0 : index
    %c0_10 = arith.constant 0 : index
    %c0_11 = arith.constant 0 : index
    %10 = vector.load %arg5[%c0_8, %c0_9, %c0_10, %c0_11] : memref<1x2x256x256xf32, #tpu.memory_space<vmem>>, vector<1x1x256x256xf32>
    %11 = vector.shape_cast %10 : vector<1x1x256x256xf32> to vector<256x256xf32>
    %cst_12 = arith.constant dense<0.000000e+00> : vector<256x256xf32>
    %12 = tpu.matmul %11, %9, %cst_12 {dimension_numbers = #tpu.dot_dimension_numbers<[1], [0], [0], [1], [0, 0, 1, 1], [], []>} : vector<256x256xf32>, vector<256x256xf32>, vector<256x256xf32> -> vector<256x256xf32>
    %c0_13 = arith.constant 0 : index
    %c0_14 = arith.constant 0 : index
    %c0_15 = arith.constant 0 : index
    %c0_16 = arith.constant 0 : index
    %13 = vector.load %arg6[%c0_13, %c0_14, %c0_15, %c0_16] : memref<1x2x256x1xf32, #tpu.memory_space<vmem>>, vector<1x1x256x1xf32>
    %14 = vector.shape_cast %13 : vector<1x1x256x1xf32> to vector<256x1xf32>
    %15 = vector.broadcast %14 : vector<256x1xf32> to vector<256x256xf32>
    %16 = arith.addf %12, %15 : vector<256x256xf32>
    %cst_17 = arith.constant 0.000000e+00 : f32
    %17 = vector.broadcast %cst_17 : f32 to vector<256x256xf32>
    %18 = arith.maximumf %16, %17 : vector<256x256xf32>
    %c0_18 = arith.constant 0 : index
    %c1 = arith.constant 1 : index
    %c0_19 = arith.constant 0 : index
    %c0_20 = arith.constant 0 : index
    %19 = vector.load %arg5[%c0_18, %c1, %c0_19, %c0_20] : memref<1x2x256x256xf32, #tpu.memory_space<vmem>>, vector<1x1x256x256xf32>
    %20 = vector.shape_cast %19 : vector<1x1x256x256xf32> to vector<256x256xf32>
    %cst_21 = arith.constant dense<0.000000e+00> : vector<256x256xf32>
    %21 = tpu.matmul %20, %18, %cst_21 {dimension_numbers = #tpu.dot_dimension_numbers<[1], [0], [0], [1], [0, 0, 1, 1], [], []>} : vector<256x256xf32>, vector<256x256xf32>, vector<256x256xf32> -> vector<256x256xf32>
    %c0_22 = arith.constant 0 : index
    %c1_23 = arith.constant 1 : index
    %c0_24 = arith.constant 0 : index
    %c0_25 = arith.constant 0 : index
    %22 = vector.load %arg6[%c0_22, %c1_23, %c0_24, %c0_25] : memref<1x2x256x1xf32, #tpu.memory_space<vmem>>, vector<1x1x256x1xf32>
    %23 = vector.shape_cast %22 : vector<1x1x256x1xf32> to vector<256x1xf32>
    %24 = vector.broadcast %23 : vector<256x1xf32> to vector<256x256xf32>
    %25 = arith.addf %21, %24 : vector<256x256xf32>
    %cst_26 = arith.constant 0.000000e+00 : f32
    %26 = vector.broadcast %cst_26 : f32 to vector<256x256xf32>
    %27 = arith.maximumf %25, %26 : vector<256x256xf32>
    %c0_27 = arith.constant 0 : index
    %c0_28 = arith.constant 0 : index
    %c0_29 = arith.constant 0 : index
    %28 = vector.load %arg7[%c0_27, %c0_28, %c0_29] : memref<1x8x256xf32, #tpu.memory_space<vmem>>, vector<1x8x256xf32>
    %29 = vector.shape_cast %28 : vector<1x8x256xf32> to vector<8x256xf32>
    %cst_30 = arith.constant dense<0.000000e+00> : vector<8x256xf32>
    %30 = tpu.matmul %29, %27, %cst_30 {dimension_numbers = #tpu.dot_dimension_numbers<[1], [0], [0], [1], [0, 0, 1, 1], [], []>} : vector<8x256xf32>, vector<256x256xf32>, vector<8x256xf32> -> vector<8x256xf32>
    %c0_31 = arith.constant 0 : index
    %c0_32 = arith.constant 0 : index
    %c0_33 = arith.constant 0 : index
    %31 = vector.load %arg8[%c0_31, %c0_32, %c0_33] : memref<1x8x1xf32, #tpu.memory_space<vmem>>, vector<1x8x1xf32>
    %32 = vector.shape_cast %31 : vector<1x8x1xf32> to vector<8x1xf32>
    %33 = vector.broadcast %32 : vector<8x1xf32> to vector<8x256xf32>
    %34 = arith.addf %30, %33 : vector<8x256xf32>
    %c0_34 = arith.constant 0 : index
    %c0_35 = arith.constant 0 : index
    %35 = vector.load %arg9[%c0_34, %c0_35] : memref<8x256xf32, #tpu.memory_space<vmem>>, vector<8x256xf32>
    tpu.vector_store %arg9[%c0_34, %c0_35], %34 {strides = array<i32>} : memref<8x256xf32, #tpu.memory_space<vmem>>, vector<8x256xf32>,
    return
  }
  func.func @transform_0(%arg0: i32, %arg1: i32) -> (i32, i32) {
    %c0_i32 = arith.constant 0 : i32
    return %arg0, %arg1 : i32, i32
  }
  func.func @transform_1(%arg0: i32, %arg1: i32) -> (i32, i32, i32) {
    %c0_i32 = arith.constant 0 : i32
    %c0_i32_0 = arith.constant 0 : i32
    %c0_i32_1 = arith.constant 0 : i32
    return %arg0, %c0_i32, %c0_i32_0 : i32, i32, i32
  }
  func.func @transform_2(%arg0: i32, %arg1: i32) -> (i32, i32, i32) {
    %c0_i32 = arith.constant 0 : i32
    %c0_i32_0 = arith.constant 0 : i32
    %c0_i32_1 = arith.constant 0 : i32
    return %arg0, %c0_i32, %c0_i32_0 : i32, i32, i32
  }
  func.func @transform_3(%arg0: i32, %arg1: i32) -> (i32, i32, i32, i32) {
    %c0_i32 = arith.constant 0 : i32
    %c0_i32_0 = arith.constant 0 : i32
    %c0_i32_1 = arith.constant 0 : i32
    %c0_i32_2 = arith.constant 0 : i32
    return %arg0, %c0_i32, %c0_i32_0, %c0_i32_1 : i32, i32, i32, i32
  }
  func.func @transform_4(%arg0: i32, %arg1: i32) -> (i32, i32, i32, i32) {
    %c0_i32 = arith.constant 0 : i32
    %c0_i32_0 = arith.constant 0 : i32
    %c0_i32_1 = arith.constant 0 : i32
    %c0_i32_2 = arith.constant 0 : i32
    return %arg0, %c0_i32, %c0_i32_0, %c0_i32_1 : i32, i32, i32, i32
  }
  func.func @transform_5(%arg0: i32, %arg1: i32) -> (i32, i32, i32) {
    %c0_i32 = arith.constant 0 : i32
    %c0_i32_0 = arith.constant 0 : i32
    %c0_i32_1 = arith.constant 0 : i32
    return %arg0, %c0_i32, %c0_i32_0 : i32, i32, i32
  }
  func.func @transform_6(%arg0: i32, %arg1: i32) -> (i32, i32, i32) {
    %c0_i32 = arith.constant 0 : i32
    %c0_i32_0 = arith.constant 0 : i32
    %c0_i32_1 = arith.constant 0 : i32
    return %arg0, %c0_i32, %c0_i32_0 : i32, i32, i32
  }
  func.func @transform_7(%arg0: i32, %arg1: i32) -> (i32, i32) {
    %c0_i32 = arith.constant 0 : i32
    return %arg0, %arg1 : i32, i32
  }
}

</mosaic_0001>

<llo_original>
// kernel: tpu_custom_call.1
$region0: #{tpu_custom_call.1}
  #allocation0 [shape = 'u32[]', space=smem, size = 0x4, offset = 0x4, fixed_abs, tag = 'smem constant byte address 0x4 - core index']
  #allocation1 [shape = 'u32[144,128]{1,0:T(1,128)}', space=vmem, size = 0x12000, scoped, tag = 'internal scratch']
  %s0 = inlined_call_operand.vmem [shape: f32[8,256], index: 0, kind: input, shape index: {}]
  %s1 = inlined_call_operand.vmem [shape: f32[1,256,8], index: 1, kind: input, shape index: {}]
  %s2 = inlined_call_operand.vmem [shape: f32[1,256,1], index: 2, kind: input, shape index: {}]
  %s3 = inlined_call_operand.vmem [shape: f32[1,2,256,256], index: 3, kind: input, shape index: {}]
  %s4 = inlined_call_operand.vmem [shape: f32[1,2,256,1], index: 4, kind: input, shape index: {}]
  %s5 = inlined_call_operand.vmem [shape: f32[1,8,256], index: 5, kind: input, shape index: {}]
  %s6 = inlined_call_operand.vmem [shape: f32[1,8,1], index: 6, kind: input, shape index: {}]
  %s7 = inlined_call_operand.hbm [shape: f32[8,256], index: 7, kind: output, shape index: {}]
  %s8 = sld [smem:[#allocation0]]
  $region38: #{tpu_custom_call.1} parent=0
    _
  %s10 = ssub.s32 1, %s8
  %s11 = scalar_select 0, %s10, %s8
  $region1: #{tpu_custom_call.1} parent=0
    #allocation2 [shape = 'u8[8192]{0}', space=vmem, size = 0x2000, scoped, tag = 'output window, operand 0, single buffered']
    #allocation3 [shape = 's32[1]{0}', space=sflag, size = 0x4, scoped, tag = 'scoped memory for tpu_custom_call.1']
    %12 = vsyncpa [#allocation3], 0
    // Predicated region
    $region2: #{tpu_custom_call.1} parent=1 // pred_check
      _
    $region3: #{tpu_custom_call.1} parent=1 // pred_check_branch
      %14 = sbr.rel (0) target = $region5
    $region4: #{tpu_custom_call.1} parent=1 // pred_region
      _
    $region5: #{tpu_custom_call.1} parent=1 // pred_fallthru
      _
    // Predicated region
    $region6: #{tpu_custom_call.1} parent=1 // pred_check
      _
    $region7: #{tpu_custom_call.1} parent=1 // pred_check_branch
      %16 = sbr.rel (0) target = $region9
    $region8: #{tpu_custom_call.1} parent=1 // pred_region
      _
    $region9: #{tpu_custom_call.1} parent=1 // pred_fallthru
      _
    // Predicated region
    $region10: #{tpu_custom_call.1} parent=1 // pred_check
      _
    $region11: #{tpu_custom_call.1} parent=1 // pred_check_branch
      %18 = sbr.rel (0) target = $region13
    $region12: #{tpu_custom_call.1} parent=1 // pred_region
      _
    $region13: #{tpu_custom_call.1} parent=1 // pred_fallthru
      _
    // Predicated region
    $region14: #{tpu_custom_call.1} parent=1 // pred_check
      _
    $region15: #{tpu_custom_call.1} parent=1 // pred_check_branch
      %20 = sbr.rel (0) target = $region17
    $region16: #{tpu_custom_call.1} parent=1 // pred_region
      _
    $region17: #{tpu_custom_call.1} parent=1 // pred_fallthru
      _
    // Predicated region
    $region18: #{tpu_custom_call.1} parent=1 // pred_check
      _
    $region19: #{tpu_custom_call.1} parent=1 // pred_check_branch
      %22 = sbr.rel (0) target = $region21
    $region20: #{tpu_custom_call.1} parent=1 // pred_region
      _
    $region21: #{tpu_custom_call.1} parent=1 // pred_fallthru
      _
    // Predicated region
    $region22: #{tpu_custom_call.1} parent=1 // pred_check
      _
    $region23: #{tpu_custom_call.1} parent=1 // pred_check_branch
      %24 = sbr.rel (0) target = $region25
    $region24: #{tpu_custom_call.1} parent=1 // pred_region
      _
    $region25: #{tpu_custom_call.1} parent=1 // pred_fallthru
      _
    // Predicated region
    $region26: #{tpu_custom_call.1} parent=1 // pred_check
      _
    $region27: #{tpu_custom_call.1} parent=1 // pred_check_branch
      %26 = sbr.rel (0) target = $region29
    $region28: #{tpu_custom_call.1} parent=1 // pred_region
      _
    $region29: #{tpu_custom_call.1} parent=1 // pred_fallthru
      _
    %v27 = vld [vmem:[%s0] sm:$0xff]
    %v28 = vld [vmem:[%s0 + $0x8] sm:$0xff]
    %v29 = vld [vmem:[%s1] sm:$0xff]
    %v30 = vld [vmem:[%s1 + $0x8] sm:$0xff]
    %v31 = vld [vmem:[%s1 + $0x10] sm:$0xff]
    %v32 = vld [vmem:[%s1 + $0x18] sm:$0xff]
    %v33 = vld [vmem:[%s1 + $0x20] sm:$0xff]
    %v34 = vld [vmem:[%s1 + $0x28] sm:$0xff]
    %v35 = vld [vmem:[%s1 + $0x30] sm:$0xff]
    %v36 = vld [vmem:[%s1 + $0x38] sm:$0xff]
    %v37 = vld [vmem:[%s1 + $0x40] sm:$0xff]
    %v38 = vld [vmem:[%s1 + $0x48] sm:$0xff]
    %v39 = vld [vmem:[%s1 + $0x50] sm:$0xff]
    %v40 = vld [vmem:[%s1 + $0x58] sm:$0xff]
    %v41 = vld [vmem:[%s1 + $0x60] sm:$0xff]
    %v42 = vld [vmem:[%s1 + $0x68] sm:$0xff]
    %v43 = vld [vmem:[%s1 + $0x70] sm:$0xff]
    %v44 = vld [vmem:[%s1 + $0x78] sm:$0xff]
    %v45 = vld [vmem:[%s1 + $0x80] sm:$0xff]
    %v46 = vld [vmem:[%s1 + $0x88] sm:$0xff]
    %v47 = vld [vmem:[%s1 + $0x90] sm:$0xff]
    %v48 = vld [vmem:[%s1 + $0x98] sm:$0xff]
    %v49 = vld [vmem:[%s1 + $0xa0] sm:$0xff]
    %v50 = vld [vmem:[%s1 + $0xa8] sm:$0xff]
    %v51 = vld [vmem:[%s1 + $0xb0] sm:$0xff]
    %v52 = vld [vmem:[%s1 + $0xb8] sm:$0xff]
    %v53 = vld [vmem:[%s1 + $0xc0] sm:$0xff]
    %v54 = vld [vmem:[%s1 + $0xc8] sm:$0xff]
    %v55 = vld [vmem:[%s1 + $0xd0] sm:$0xff]
    %v56 = vld [vmem:[%s1 + $0xd8] sm:$0xff]
    %v57 = vld [vmem:[%s1 + $0xe0] sm:$0xff]
    %v58 = vld [vmem:[%s1 + $0xe8] sm:$0xff]
    %v59 = vld [vmem:[%s1 + $0xf0] sm:$0xff]
    %v60 = vld [vmem:[%s1 + $0xf8] sm:$0xff]
    %v61 = vld [vmem:[%s2] sm:$0xff]
    %v62 = vld [vmem:[%s2 + $0x8] sm:$0xff]
    %v63 = vld [vmem:[%s2 + $0x10] sm:$0xff]
    %v64 = vld [vmem:[%s2 + $0x18] sm:$0xff]
    %v65 = vld [vmem:[%s2 + $0x20] sm:$0xff]
    %v66 = vld [vmem:[%s2 + $0x28] sm:$0xff]
    %v67 = vld [vmem:[%s2 + $0x30] sm:$0xff]
    %v68 = vld [vmem:[%s2 + $0x38] sm:$0xff]
    %v69 = vld [vmem:[%s2 + $0x40] sm:$0xff]
    %v70 = vld [vmem:[%s2 + $0x48] sm:$0xff]
    %v71 = vld [vmem:[%s2 + $0x50] sm:$0xff]
    %v72 = vld [vmem:[%s2 + $0x58] sm:$0xff]
    %v73 = vld [vmem:[%s2 + $0x60] sm:$0xff]
    %v74 = vld [vmem:[%s2 + $0x68] sm:$0xff]
    %v75 = vld [vmem:[%s2 + $0x70] sm:$0xff]
    %v76 = vld [vmem:[%s2 + $0x78] sm:$0xff]
    %v77 = vld [vmem:[%s2 + $0x80] sm:$0xff]
    %v78 = vld [vmem:[%s2 + $0x88] sm:$0xff]
    %v79 = vld [vmem:[%s2 + $0x90] sm:$0xff]
    %v80 = vld [vmem:[%s2 + $0x98] sm:$0xff]
    %v81 = vld [vmem:[%s2 + $0xa0] sm:$0xff]
    %v82 = vld [vmem:[%s2 + $0xa8] sm:$0xff]
    %v83 = vld [vmem:[%s2 + $0xb0] sm:$0xff]
    %v84 = vld [vmem:[%s2 + $0xb8] sm:$0xff]
    %v85 = vld [vmem:[%s2 + $0xc0] sm:$0xff]
    %v86 = vld [vmem:[%s2 + $0xc8] sm:$0xff]
    %v87 = vld [vmem:[%s2 + $0xd0] sm:$0xff]
    %v88 = vld [vmem:[%s2 + $0xd8] sm:$0xff]
    %v89 = vld [vmem:[%s2 + $0xe0] sm:$0xff]
    %v90 = vld [vmem:[%s2 + $0xe8] sm:$0xff]
    %v91 = vld [vmem:[%s2 + $0xf0] sm:$0xff]
    %v92 = vld [vmem:[%s2 + $0xf8] sm:$0xff]
    %94 = vset.pattern.permute.xlu0 0
    %95 = vperm.xlu0 %94, %v61
    %v96 = vpop.permute.xlu0 %95
    %99 = vset.pattern.permute.xlu0 0
    %100 = vperm.xlu0 %99, %v62
    %v101 = vpop.permute.xlu0 %100
    %104 = vset.pattern.permute.xlu0 0
    %105 = vperm.xlu0 %104, %v63
    %v106 = vpop.permute.xlu0 %105
    %109 = vset.pattern.permute.xlu0 0
    %110 = vperm.xlu0 %109, %v64
    %v111 = vpop.permute.xlu0 %110
    %114 = vset.pattern.permute.xlu0 0
    %115 = vperm.xlu0 %114, %v65
    %v116 = vpop.permute.xlu0 %115
    %119 = vset.pattern.permute.xlu0 0
    %120 = vperm.xlu0 %119, %v66
    %v121 = vpop.permute.xlu0 %120
    %124 = vset.pattern.permute.xlu0 0
    %125 = vperm.xlu0 %124, %v67
    %v126 = vpop.permute.xlu0 %125
    %129 = vset.pattern.permute.xlu0 0
    %130 = vperm.xlu0 %129, %v68
    %v131 = vpop.permute.xlu0 %130
    %134 = vset.pattern.permute.xlu0 0
    %135 = vperm.xlu0 %134, %v69
    %v136 = vpop.permute.xlu0 %135
    %139 = vset.pattern.permute.xlu0 0
    %140 = vperm.xlu0 %139, %v70
    %v141 = vpop.permute.xlu0 %140
    %144 = vset.pattern.permute.xlu0 0
    %145 = vperm.xlu0 %144, %v71
    %v146 = vpop.permute.xlu0 %145
    %149 = vset.pattern.permute.xlu0 0
    %150 = vperm.xlu0 %149, %v72
    %v151 = vpop.permute.xlu0 %150
    %154 = vset.pattern.permute.xlu0 0
    %155 = vperm.xlu0 %154, %v73
    %v156 = vpop.permute.xlu0 %155
    %159 = vset.pattern.permute.xlu0 0
    %160 = vperm.xlu0 %159, %v74
    %v161 = vpop.permute.xlu0 %160
    %164 = vset.pattern.permute.xlu0 0
    %165 = vperm.xlu0 %164, %v75
    %v166 = vpop.permute.xlu0 %165
    %169 = vset.pattern.permute.xlu0 0
    %170 = vperm.xlu0 %169, %v76
    %v171 = vpop.permute.xlu0 %170
    %174 = vset.pattern.permute.xlu0 0
    %175 = vperm.xlu0 %174, %v77
    %v176 = vpop.permute.xlu0 %175
    %179 = vset.pattern.permute.xlu0 0
    %180 = vperm.xlu0 %179, %v78
    %v181 = vpop.permute.xlu0 %180
    %184 = vset.pattern.permute.xlu0 0
    %185 = vperm.xlu0 %184, %v79
    %v186 = vpop.permute.xlu0 %185
    %189 = vset.pattern.permute.xlu0 0
    %190 = vperm.xlu0 %189, %v80
    %v191 = vpop.permute.xlu0 %190
    %194 = vset.pattern.permute.xlu0 0
    %195 = vperm.xlu0 %194, %v81
    %v196 = vpop.permute.xlu0 %195
    %199 = vset.pattern.permute.xlu0 0
    %200 = vperm.xlu0 %199, %v82
    %v201 = vpop.permute.xlu0 %200
    %204 = vset.pattern.permute.xlu0 0
    %205 = vperm.xlu0 %204, %v83
    %v206 = vpop.permute.xlu0 %205
    %209 = vset.pattern.permute.xlu0 0
    %210 = vperm.xlu0 %209, %v84
    %v211 = vpop.permute.xlu0 %210
    %214 = vset.pattern.permute.xlu0 0
    %215 = vperm.xlu0 %214, %v85
    %v216 = vpop.permute.xlu0 %215
    %219 = vset.pattern.permute.xlu0 0
    %220 = vperm.xlu0 %219, %v86
    %v221 = vpop.permute.xlu0 %220
    %224 = vset.pattern.permute.xlu0 0
    %225 = vperm.xlu0 %224, %v87
    %v226 = vpop.permute.xlu0 %225
    %229 = vset.pattern.permute.xlu0 0
    %230 = vperm.xlu0 %229, %v88
    %v231 = vpop.permute.xlu0 %230
    %234 = vset.pattern.permute.xlu0 0
    %235 = vperm.xlu0 %234, %v89
    %v236 = vpop.permute.xlu0 %235
    %239 = vset.pattern.permute.xlu0 0
    %240 = vperm.xlu0 %239, %v90
    %v241 = vpop.permute.xlu0 %240
    %244 = vset.pattern.permute.xlu0 0
    %245 = vperm.xlu0 %244, %v91
    %v246 = vpop.permute.xlu0 %245
    %249 = vset.pattern.permute.xlu0 0
    %250 = vperm.xlu0 %249, %v92
    %v251 = vpop.permute.xlu0 %250
    %vm253 = vcmask 64512
    %v255 = vsel %vm253, %v29, 0
    %v258 = vsel %vm253, %v30, 0
    %v261 = vsel %vm253, %v31, 0
    %v264 = vsel %vm253, %v32, 0
    %v267 = vsel %vm253, %v33, 0
    %v270 = vsel %vm253, %v34, 0
    %v273 = vsel %vm253, %v35, 0
    %v276 = vsel %vm253, %v36, 0
    %v279 = vsel %vm253, %v37, 0
    %v282 = vsel %vm253, %v38, 0
    %v285 = vsel %vm253, %v39, 0
    %v288 = vsel %vm253, %v40, 0
    %v291 = vsel %vm253, %v41, 0
    %v294 = vsel %vm253, %v42, 0
    %v297 = vsel %vm253, %v43, 0
    %v300 = vsel %vm253, %v44, 0
    %v303 = vsel %vm253, %v45, 0
    %v306 = vsel %vm253, %v46, 0
    %v309 = vsel %vm253, %v47, 0
    %v312 = vsel %vm253, %v48, 0
    %v315 = vsel %vm253, %v49, 0
    %v318 = vsel %vm253, %v50, 0
    %v321 = vsel %vm253, %v51, 0
    %v324 = vsel %vm253, %v52, 0
    %v327 = vsel %vm253, %v53, 0
    %v330 = vsel %vm253, %v54, 0
    %v333 = vsel %vm253, %v55, 0
    %v336 = vsel %vm253, %v56, 0
    %v339 = vsel %vm253, %v57, 0
    %v342 = vsel %vm253, %v58, 0
    %v345 = vsel %vm253, %v59, 0
    %v348 = vsel %vm253, %v60, 0
    %350 = vmatprep.subr.mxu0 %v28
    %351 = vmatpush1.msra.mxu0 %v27
    %352 = vmatprep.subr.mxu0 0.0
    %353 = vmatpush1.msra.mxu0 0.0
    %354 = vmatprep.subr.mxu0 0.0
    %355 = vmatpush1.msra.mxu0 0.0
    %356 = vmatprep.subr.mxu0 0.0
    %357 = vmatpush1.msra.mxu0 0.0
    %358 = vmatprep.subr.mxu0 0.0
    %359 = vmatpush1.msra.mxu0 0.0
    %360 = vmatprep.subr.mxu0 0.0
    %361 = vmatpush1.msra.mxu0 0.0
    %362 = vmatprep.subr.mxu0 0.0
    %363 = vmatpush1.msra.mxu0 0.0
    %364 = vmatprep.subr.mxu0 0.0
    %365 = vmatpush1.msra.mxu0 0.0
    %366 = vmatprep.subr.mxu0 0.0
    %367 = vmatpush1.msra.mxu0 0.0
    %368 = vmatprep.subr.mxu0 0.0
    %369 = vmatpush1.msra.mxu0 0.0
    %370 = vmatprep.subr.mxu0 0.0
    %371 = vmatpush1.msra.mxu0 0.0
    %372 = vmatprep.subr.mxu0 0.0
    %373 = vmatpush1.msra.mxu0 0.0
    %374 = vmatprep.subr.mxu0 0.0
    %375 = vmatpush1.msra.mxu0 0.0
    %376 = vmatprep.subr.mxu0 0.0
    %377 = vmatpush1.msra.mxu0 0.0
    %378 = vmatprep.subr.mxu0 0.0
    %379 = vmatpush1.msra.mxu0 0.0
    %380 = vmatprep.subr.mxu0 0.0
    %381 = vmatpush1.msra.mxu0 0.0
    %382 = vmatprep.subr.mxu0 0.0
    %383 = vmatpush1.msra.mxu0 0.0
    %384 = vmatprep.subr.mxu0 0.0
    %385 = vmatpush1.msra.mxu0 0.0
    %386 = vmatprep.subr.mxu0 0.0
    %387 = vmatpush1.msra.mxu0 0.0
    %388 = vmatprep.subr.mxu0 0.0
    %389 = vmatpush1.msra.mxu0 0.0
    %390 = vmatprep.subr.mxu0 0.0
    %391 = vmatpush1.msra.mxu0 0.0
    %392 = vmatprep.subr.mxu0 0.0
    %393 = vmatpush1.msra.mxu0 0.0
    %394 = vmatprep.subr.mxu0 0.0
    %395 = vmatpush1.msra.mxu0 0.0
    %396 = vmatprep.subr.mxu0 0.0
    %397 = vmatpush1.msra.mxu0 0.0
    %398 = vmatprep.subr.mxu0 0.0
    %399 = vmatpush1.msra.mxu0 0.0
    %400 = vmatprep.subr.mxu0 0.0
    %401 = vmatpush1.msra.mxu0 0.0
    %402 = vmatprep.subr.mxu0 0.0
    %403 = vmatpush1.msra.mxu0 0.0
    %404 = vmatprep.subr.mxu0 0.0
    %405 = vmatpush1.msra.mxu0 0.0
    %406 = vmatprep.subr.mxu0 0.0
    %407 = vmatpush1.msra.mxu0 0.0
    %408 = vmatprep.subr.mxu0 0.0
    %409 = vmatpush1.msra.mxu0 0.0
    %410 = vmatprep.subr.mxu0 0.0
    %411 = vmatpush1.msra.mxu0 0.0
    %412 = vmatprep.subr.mxu0 0.0
    %413 = vmatpush1.msra.mxu0 0.0
    %414 = vmatprep.mubr.f32.mxu0 0.0
    %415 = vmatmul.mubr.f32.gmra.mrb[0].mxu0 %v255
    %v416 = vpop.f32.mrb[0].mxu0
    %v417 = vadd.f32 %v96, %v416
    %v418 = vpop.f32.mrb[0].mxu0
    %v419 = vadd.f32 %v96, %v418
    %420 = vmatprep.mubr.f32.mxu0 0.0
    %421 = vmatmul.mubr.f32.gmra.mrb[0].mxu0 %v258
    %v422 = vpop.f32.mrb[0].mxu0
    %v423 = vadd.f32 %v101, %v422
    %v424 = vpop.f32.mrb[0].mxu0
    %v425 = vadd.f32 %v101, %v424
    %426 = vmatprep.mubr.f32.mxu0 0.0
    %427 = vmatmul.mubr.f32.gmra.mrb[0].mxu0 %v261
    %v428 = vpop.f32.mrb[0].mxu0
    %v429 = vadd.f32 %v106, %v428
    %v430 = vpop.f32.mrb[0].mxu0
    %v431 = vadd.f32 %v106, %v430
    %432 = vmatprep.mubr.f32.mxu0 0.0
    %433 = vmatmul.mubr.f32.gmra.mrb[0].mxu0 %v264
    %v434 = vpop.f32.mrb[0].mxu0
    %v435 = vadd.f32 %v111, %v434
    %v436 = vpop.f32.mrb[0].mxu0
    %v437 = vadd.f32 %v111, %v436
    %438 = vmatprep.mubr.f32.mxu0 0.0
    %439 = vmatmul.mubr.f32.gmra.mrb[0].mxu0 %v267
    %v440 = vpop.f32.mrb[0].mxu0
    %v441 = vadd.f32 %v116, %v440
    %v442 = vpop.f32.mrb[0].mxu0
    %v443 = vadd.f32 %v116, %v442
    %444 = vmatprep.mubr.f32.mxu0 0.0
    %445 = vmatmul.mubr.f32.gmra.mrb[0].mxu0 %v270
    %v446 = vpop.f32.mrb[0].mxu0
    %v447 = vadd.f32 %v121, %v446
    %v448 = vpop.f32.mrb[0].mxu0
    %v449 = vadd.f32 %v121, %v448
    %450 = vmatprep.mubr.f32.mxu0 0.0
    %451 = vmatmul.mubr.f32.gmra.mrb[0].mxu0 %v273
    %v452 = vpop.f32.mrb[0].mxu0
    %v453 = vadd.f32 %v126, %v452
    %v454 = vpop.f32.mrb[0].mxu0
    %v455 = vadd.f32 %v126, %v454
    %456 = vmatprep.mubr.f32.mxu0 0.0
    %457 = vmatmul.mubr.f32.gmra.mrb[0].mxu0 %v276
    %v458 = vpop.f32.mrb[0].mxu0
    %v459 = vadd.f32 %v131, %v458
    %v460 = vpop.f32.mrb[0].mxu0
    %v461 = vadd.f32 %v131, %v460
    %462 = vmatprep.mubr.f32.mxu0 0.0
    %463 = vmatmul.mubr.f32.gmra.mrb[0].mxu0 %v279
    %v464 = vpop.f32.mrb[0].mxu0
    %v465 = vadd.f32 %v136, %v464
    %v466 = vpop.f32.mrb[0].mxu0
    %v467 = vadd.f32 %v136, %v466
    %468 = vmatprep.mubr.f32.mxu0 0.0
    %469 = vmatmul.mubr.f32.gmra.mrb[0].mxu0 %v282
    %v470 = vpop.f32.mrb[0].mxu0
    %v471 = vadd.f32 %v141, %v470
    %v472 = vpop.f32.mrb[0].mxu0
    %v473 = vadd.f32 %v141, %v472
    %474 = vmatprep.mubr.f32.mxu0 0.0
    %475 = vmatmul.mubr.f32.gmra.mrb[0].mxu0 %v285
    %v476 = vpop.f32.mrb[0].mxu0
    %v477 = vadd.f32 %v146, %v476
    %v478 = vpop.f32.mrb[0].mxu0
    %v479 = vadd.f32 %v146, %v478
    %480 = vmatprep.mubr.f32.mxu0 0.0
    %481 = vmatmul.mubr.f32.gmra.mrb[0].mxu0 %v288
    %v482 = vpop.f32.mrb[0].mxu0
    %v483 = vadd.f32 %v151, %v482
    %v484 = vpop.f32.mrb[0].mxu0
    %v485 = vadd.f32 %v151, %v484
    %486 = vmatprep.mubr.f32.mxu0 0.0
    %487 = vmatmul.mubr.f32.gmra.mrb[0].mxu0 %v291
    %v488 = vpop.f32.mrb[0].mxu0
    %v489 = vadd.f32 %v156, %v488
    %v490 = vpop.f32.mrb[0].mxu0
    %v491 = vadd.f32 %v156, %v490
    %492 = vmatprep.mubr.f32.mxu0 0.0
    %493 = vmatmul.mubr.f32.gmra.mrb[0].mxu0 %v294
    %v494 = vpop.f32.mrb[0].mxu0
    %v495 = vadd.f32 %v161, %v494
    %v496 = vpop.f32.mrb[0].mxu0
    %v497 = vadd.f32 %v161, %v496
    %498 = vmatprep.mubr.f32.mxu0 0.0
    %499 = vmatmul.mubr.f32.gmra.mrb[0].mxu0 %v297
    %v500 = vpop.f32.mrb[0].mxu0
    %v501 = vadd.f32 %v166, %v500
    %v502 = vpop.f32.mrb[0].mxu0
    %v503 = vadd.f32 %v166, %v502
    %504 = vmatprep.mubr.f32.mxu0 0.0
    %505 = vmatmul.mubr.f32.gmra.mrb[0].mxu0 %v300
    %v506 = vpop.f32.mrb[0].mxu0
    %v507 = vadd.f32 %v171, %v506
    %v508 = vpop.f32.mrb[0].mxu0
    %v509 = vadd.f32 %v171, %v508
    %510 = vmatprep.mubr.f32.mxu0 0.0
    %511 = vmatmul.mubr.f32.gmra.mrb[0].mxu0 %v303
    %v512 = vpop.f32.mrb[0].mxu0
    %v513 = vadd.f32 %v176, %v512
    %v514 = vpop.f32.mrb[0].mxu0
    %v515 = vadd.f32 %v176, %v514
    %516 = vmatprep.mubr.f32.mxu0 0.0
    %517 = vmatmul.mubr.f32.gmra.mrb[0].mxu0 %v306
    %v518 = vpop.f32.mrb[0].mxu0
    %v519 = vadd.f32 %v181, %v518
    %v520 = vpop.f32.mrb[0].mxu0
    %v521 = vadd.f32 %v181, %v520
    %522 = vmatprep.mubr.f32.mxu0 0.0
    %523 = vmatmul.mubr.f32.gmra.mrb[0].mxu0 %v309
    %v524 = vpop.f32.mrb[0].mxu0
    %v525 = vadd.f32 %v186, %v524
    %v526 = vpop.f32.mrb[0].mxu0
    %v527 = vadd.f32 %v186, %v526
    %528 = vmatprep.mubr.f32.mxu0 0.0
    %529 = vmatmul.mubr.f32.gmra.mrb[0].mxu0 %v312
    %v530 = vpop.f32.mrb[0].mxu0
    %v531 = vadd.f32 %v191, %v530
    %v532 = vpop.f32.mrb[0].mxu0
    %v533 = vadd.f32 %v191, %v532
    %534 = vmatprep.mubr.f32.mxu0 0.0
    %535 = vmatmul.mubr.f32.gmra.mrb[0].mxu0 %v315
    %v536 = vpop.f32.mrb[0].mxu0
    %v537 = vadd.f32 %v196, %v536
    %v538 = vpop.f32.mrb[0].mxu0
    %v539 = vadd.f32 %v196, %v538
    %540 = vmatprep.mubr.f32.mxu0 0.0
    %541 = vmatmul.mubr.f32.gmra.mrb[0].mxu0 %v318
    %v542 = vpop.f32.mrb[0].mxu0
    %v543 = vadd.f32 %v201, %v542
    %v544 = vpop.f32.mrb[0].mxu0
    %v545 = vadd.f32 %v201, %v544
    %546 = vmatprep.mubr.f32.mxu0 0.0
    %547 = vmatmul.mubr.f32.gmra.mrb[0].mxu0 %v321
    %v548 = vpop.f32.mrb[0].mxu0
    %v549 = vadd.f32 %v206, %v548
    %v550 = vpop.f32.mrb[0].mxu0
    %v551 = vadd.f32 %v206, %v550
    %552 = vmatprep.mubr.f32.mxu0 0.0
    %553 = vmatmul.mubr.f32.gmra.mrb[0].mxu0 %v324
    %v554 = vpop.f32.mrb[0].mxu0
    %v555 = vadd.f32 %v211, %v554
    %v556 = vpop.f32.mrb[0].mxu0
    %v557 = vadd.f32 %v211, %v556
    %558 = vmatprep.mubr.f32.mxu0 0.0
    %559 = vmatmul.mubr.f32.gmra.mrb[0].mxu0 %v327
    %v560 = vpop.f32.mrb[0].mxu0
    %v561 = vadd.f32 %v216, %v560
    %v562 = vpop.f32.mrb[0].mxu0
    %v563 = vadd.f32 %v216, %v562
    %564 = vmatprep.mubr.f32.mxu0 0.0
    %565 = vmatmul.mubr.f32.gmra.mrb[0].mxu0 %v330
    %v566 = vpop.f32.mrb[0].mxu0
    %v567 = vadd.f32 %v221, %v566
    %v568 = vpop.f32.mrb[0].mxu0
    %v569 = vadd.f32 %v221, %v568
    %570 = vmatprep.mubr.f32.mxu0 0.0
    %571 = vmatmul.mubr.f32.gmra.mrb[0].mxu0 %v333
    %v572 = vpop.f32.mrb[0].mxu0
    %v573 = vadd.f32 %v226, %v572
    %v574 = vpop.f32.mrb[0].mxu0
    %v575 = vadd.f32 %v226, %v574
    %576 = vmatprep.mubr.f32.mxu0 0.0
    %577 = vmatmul.mubr.f32.gmra.mrb[0].mxu0 %v336
    %v578 = vpop.f32.mrb[0].mxu0
    %v579 = vadd.f32 %v231, %v578
    %v580 = vpop.f32.mrb[0].mxu0
    %v581 = vadd.f32 %v231, %v580
    %582 = vmatprep.mubr.f32.mxu0 0.0
    %583 = vmatmul.mubr.f32.gmra.mrb[0].mxu0 %v339
    %v584 = vpop.f32.mrb[0].mxu0
    %v585 = vadd.f32 %v236, %v584
    %v586 = vpop.f32.mrb[0].mxu0
    %v587 = vadd.f32 %v236, %v586
    %588 = vmatprep.mubr.f32.mxu0 0.0
    %589 = vmatmul.mubr.f32.gmra.mrb[0].mxu0 %v342
    %v590 = vpop.f32.mrb[0].mxu0
    %v591 = vadd.f32 %v241, %v590
    %v592 = vpop.f32.mrb[0].mxu0
    %v593 = vadd.f32 %v241, %v592
    %594 = vmatprep.mubr.f32.mxu0 0.0
    %595 = vmatmul.mubr.f32.gmra.mrb[0].mxu0 %v345
    %v596 = vpop.f32.mrb[0].mxu0
    %v597 = vadd.f32 %v246, %v596
    %v598 = vpop.f32.mrb[0].mxu0
    %v599 = vadd.f32 %v246, %v598
    %600 = vmatprep.mubr.f32.mxu0 0.0
    %601 = vmatmul.mubr.f32.gmra.mrb[0].mxu0 %v348
    %v602 = vpop.f32.mrb[0].mxu0
    %v603 = vadd.f32 %v251, %v602
    %v604 = vpop.f32.mrb[0].mxu0
    %v605 = vadd.f32 %v251, %v604
    %606 = vdwg.mxu0
    %v607 = vmax.f32 %v417, 0.0
    %v608 = vmax.f32 %v419, 0.0
    %v609 = vmax.f32 %v423, 0.0
    %v610 = vmax.f32 %v425, 0.0
    %v611 = vmax.f32 %v429, 0.0
    %v612 = vmax.f32 %v431, 0.0
    %v613 = vmax.f32 %v435, 0.0
    %v614 = vmax.f32 %v437, 0.0
    %v615 = vmax.f32 %v441, 0.0
    %v616 = vmax.f32 %v443, 0.0
    %v617 = vmax.f32 %v447, 0.0
    %v618 = vmax.f32 %v449, 0.0
    %v619 = vmax.f32 %v453, 0.0
    %v620 = vmax.f32 %v455, 0.0
    %v621 = vmax.f32 %v459, 0.0
    %v622 = vmax.f32 %v461, 0.0
    %v623 = vmax.f32 %v465, 0.0
    %v624 = vmax.f32 %v467, 0.0
    %v625 = vmax.f32 %v471, 0.0
    %v626 = vmax.f32 %v473, 0.0
    %v627 = vmax.f32 %v477, 0.0
    %v628 = vmax.f32 %v479, 0.0
    %v629 = vmax.f32 %v483, 0.0
    %v630 = vmax.f32 %v485, 0.0
    %v631 = vmax.f32 %v489, 0.0
    %v632 = vmax.f32 %v491, 0.0
    %v633 = vmax.f32 %v495, 0.0
    %v634 = vmax.f32 %v497, 0.0
    %v635 = vmax.f32 %v501, 0.0
    %v636 = vmax.f32 %v503, 0.0
    %v637 = vmax.f32 %v507, 0.0
    %v638 = vmax.f32 %v509, 0.0
    %v639 = vmax.f32 %v513, 0.0
    %v640 = vmax.f32 %v515, 0.0
    %v641 = vmax.f32 %v519, 0.0
    %v642 = vmax.f32 %v521, 0.0
    %v643 = vmax.f32 %v525, 0.0
    %v644 = vmax.f32 %v527, 0.0
    %v645 = vmax.f32 %v531, 0.0
    %v646 = vmax.f32 %v533, 0.0
    %v647 = vmax.f32 %v537, 0.0
    %v648 = vmax.f32 %v539, 0.0
    %v649 = vmax.f32 %v543, 0.0
    %v650 = vmax.f32 %v545, 0.0
    %v651 = vmax.f32 %v549, 0.0
    %v652 = vmax.f32 %v551, 0.0
    %v653 = vmax.f32 %v555, 0.0
    %v654 = vmax.f32 %v557, 0.0
    %v655 = vmax.f32 %v561, 0.0
    %v656 = vmax.f32 %v563, 0.0
    %v657 = vmax.f32 %v567, 0.0
    %v658 = vmax.f32 %v569, 0.0
    %v659 = vmax.f32 %v573, 0.0
    %v660 = vmax.f32 %v575, 0.0
    %v661 = vmax.f32 %v579, 0.0
    %v662 = vmax.f32 %v581, 0.0
    %v663 = vmax.f32 %v585, 0.0
    %v664 = vmax.f32 %v587, 0.0
    %v665 = vmax.f32 %v591, 0.0
    %v666 = vmax.f32 %v593, 0.0
    %v667 = vmax.f32 %v597, 0.0
    %v668 = vmax.f32 %v599, 0.0
    %v669 = vmax.f32 %v603, 0.0
    %v670 = vmax.f32 %v605, 0.0
    %v671 = vld [vmem:[%s3] sm:$0xff]
    %v672 = vld [vmem:[%s3 + $0x8] sm:$0xff]
    %v673 = vld [vmem:[%s3 + $0x10] sm:$0xff]
    %v674 = vld [vmem:[%s3 + $0x18] sm:$0xff]
    %v675 = vld [vmem:[%s3 + $0x20] sm:$0xff]
    %v676 = vld [vmem:[%s3 + $0x28] sm:$0xff]
    %v677 = vld [vmem:[%s3 + $0x30] sm:$0xff]
    %v678 = vld [vmem:[%s3 + $0x38] sm:$0xff]
    %v679 = vld [vmem:[%s3 + $0x40] sm:$0xff]
    %v680 = vld [vmem:[%s3 + $0x48] sm:$0xff]
    %v681 = vld [vmem:[%s3 + $0x50] sm:$0xff]
    %v682 = vld [vmem:[%s3 + $0x58] sm:$0xff]
    %v683 = vld [vmem:[%s3 + $0x60] sm:$0xff]
    %v684 = vld [vmem:[%s3 + $0x68] sm:$0xff]
    %v685 = vld [vmem:[%s3 + $0x70] sm:$0xff]
    %v686 = vld [vmem:[%s3 + $0x78] sm:$0xff]
    %v687 = vld [vmem:[%s3 + $0x80] sm:$0xff]
    %v688 = vld [vmem:[%s3 + $0x88] sm:$0xff]
    %v689 = vld [vmem:[%s3 + $0x90] sm:$0xff]
    %v690 = vld [vmem:[%s3 + $0x98] sm:$0xff]
    %v691 = vld [vmem:[%s3 + $0xa0] sm:$0xff]
    %v692 = vld [vmem:[%s3 + $0xa8] sm:$0xff]
    %v693 = vld [vmem:[%s3 + $0xb0] sm:$0xff]
    %v694 = vld [vmem:[%s3 + $0xb8] sm:$0xff]
    %v695 = vld [vmem:[%s3 + $0xc0] sm:$0xff]
    %v696 = vld [vmem:[%s3 + $0xc8] sm:$0xff]
    %v697 = vld [vmem:[%s3 + $0xd0] sm:$0xff]
    %v698 = vld [vmem:[%s3 + $0xd8] sm:$0xff]
    %v699 = vld [vmem:[%s3 + $0xe0] sm:$0xff]
    %v700 = vld [vmem:[%s3 + $0xe8] sm:$0xff]
    %v701 = vld [vmem:[%s3 + $0xf0] sm:$0xff]
    %v702 = vld [vmem:[%s3 + $0xf8] sm:$0xff]
    %v703 = vld [vmem:[%s3 + $0x100] sm:$0xff]
    %v704 = vld [vmem:[%s3 + $0x108] sm:$0xff]
    %v705 = vld [vmem:[%s3 + $0x110] sm:$0xff]
    %v706 = vld [vmem:[%s3 + $0x118] sm:$0xff]
    %v707 = vld [vmem:[%s3 + $0x120] sm:$0xff]
    %v708 = vld [vmem:[%s3 + $0x128] sm:$0xff]
    %v709 = vld [vmem:[%s3 + $0x130] sm:$0xff]
    %v710 = vld [vmem:[%s3 + $0x138] sm:$0xff]
    %v711 = vld [vmem:[%s3 + $0x140] sm:$0xff]
    %v712 = vld [vmem:[%s3 + $0x148] sm:$0xff]
    %v713 = vld [vmem:[%s3 + $0x150] sm:$0xff]
    %v714 = vld [vmem:[%s3 + $0x158] sm:$0xff]
    %v715 = vld [vmem:[%s3 + $0x160] sm:$0xff]
    %v716 = vld [vmem:[%s3 + $0x168] sm:$0xff]
    %v717 = vld [vmem:[%s3 + $0x170] sm:$0xff]
    %v718 = vld [vmem:[%s3 + $0x178] sm:$0xff]
    %v719 = vld [vmem:[%s3 + $0x180] sm:$0xff]
    %v720 = vld [vmem:[%s3 + $0x188] sm:$0xff]
    %v721 = vld [vmem:[%s3 + $0x190] sm:$0xff]
    %v722 = vld [vmem:[%s3 + $0x198] sm:$0xff]
    %v723 = vld [vmem:[%s3 + $0x1a0] sm:$0xff]
    %v724 = vld [vmem:[%s3 + $0x1a8] sm:$0xff]
    %v725 = vld [vmem:[%s3 + $0x1b0] sm:$0xff]
    %v726 = vld [vmem:[%s3 + $0x1b8] sm:$0xff]
    %v727 = vld [vmem:[%s3 + $0x1c0] sm:$0xff]
    %v728 = vld [vmem:[%s3 + $0x1c8] sm:$0xff]
    %v729 = vld [vmem:[%s3 + $0x1d0] sm:$0xff]
    %v730 = vld [vmem:[%s3 + $0x1d8] sm:$0xff]
    %v731 = vld [vmem:[%s3 + $0x1e0] sm:$0xff]
    %v732 = vld [vmem:[%s3 + $0x1e8] sm:$0xff]
    %v733 = vld [vmem:[%s3 + $0x1f0] sm:$0xff]
    %v734 = vld [vmem:[%s3 + $0x1f8] sm:$0xff]
    %v735 = vld [vmem:[%s4] sm:$0xff]
    %v736 = vld [vmem:[%s4 + $0x8] sm:$0xff]
    %v737 = vld [vmem:[%s4 + $0x10] sm:$0xff]
    %v738 = vld [vmem:[%s4 + $0x18] sm:$0xff]
    %v739 = vld [vmem:[%s4 + $0x20] sm:$0xff]
    %v740 = vld [vmem:[%s4 + $0x28] sm:$0xff]
    %v741 = vld [vmem:[%s4 + $0x30] sm:$0xff]
    %v742 = vld [vmem:[%s4 + $0x38] sm:$0xff]
    %v743 = vld [vmem:[%s4 + $0x40] sm:$0xff]
    %v744 = vld [vmem:[%s4 + $0x48] sm:$0xff]
    %v745 = vld [vmem:[%s4 + $0x50] sm:$0xff]
    %v746 = vld [vmem:[%s4 + $0x58] sm:$0xff]
    %v747 = vld [vmem:[%s4 + $0x60] sm:$0xff]
    %v748 = vld [vmem:[%s4 + $0x68] sm:$0xff]
    %v749 = vld [vmem:[%s4 + $0x70] sm:$0xff]
    %v750 = vld [vmem:[%s4 + $0x78] sm:$0xff]
    %v751 = vld [vmem:[%s4 + $0x80] sm:$0xff]
    %v752 = vld [vmem:[%s4 + $0x88] sm:$0xff]
    %v753 = vld [vmem:[%s4 + $0x90] sm:$0xff]
    %v754 = vld [vmem:[%s4 + $0x98] sm:$0xff]
    %v755 = vld [vmem:[%s4 + $0xa0] sm:$0xff]
    %v756 = vld [vmem:[%s4 + $0xa8] sm:$0xff]
    %v757 = vld [vmem:[%s4 + $0xb0] sm:$0xff]
    %v758 = vld [vmem:[%s4 + $0xb8] sm:$0xff]
    %v759 = vld [vmem:[%s4 + $0xc0] sm:$0xff]
    %v760 = vld [vmem:[%s4 + $0xc8] sm:$0xff]
    %v761 = vld [vmem:[%s4 + $0xd0] sm:$0xff]
    %v762 = vld [vmem:[%s4 + $0xd8] sm:$0xff]
    %v763 = vld [vmem:[%s4 + $0xe0] sm:$0xff]
    %v764 = vld [vmem:[%s4 + $0xe8] sm:$0xff]
    %v765 = vld [vmem:[%s4 + $0xf0] sm:$0xff]
    %v766 = vld [vmem:[%s4 + $0xf8] sm:$0xff]
    %768 = vset.pattern.permute.xlu0 0
    %769 = vperm.xlu0 %768, %v735
    %v770 = vpop.permute.xlu0 %769
    %773 = vset.pattern.permute.xlu0 0
    %774 = vperm.xlu0 %773, %v736
    %v775 = vpop.permute.xlu0 %774
    %778 = vset.pattern.permute.xlu0 0
    %779 = vperm.xlu0 %778, %v737
    %v780 = vpop.permute.xlu0 %779
    %783 = vset.pattern.permute.xlu0 0
    %784 = vperm.xlu0 %783, %v738
    %v785 = vpop.permute.xlu0 %784
    %788 = vset.pattern.permute.xlu0 0
    %789 = vperm.xlu0 %788, %v739
    %v790 = vpop.permute.xlu0 %789
    %793 = vset.pattern.permute.xlu0 0
    %794 = vperm.xlu0 %793, %v740
    %v795 = vpop.permute.xlu0 %794
    %798 = vset.pattern.permute.xlu0 0
    %799 = vperm.xlu0 %798, %v741
    %v800 = vpop.permute.xlu0 %799
    %803 = vset.pattern.permute.xlu0 0
    %804 = vperm.xlu0 %803, %v742
    %v805 = vpop.permute.xlu0 %804
    %808 = vset.pattern.permute.xlu0 0
    %809 = vperm.xlu0 %808, %v743
    %v810 = vpop.permute.xlu0 %809
    %813 = vset.pattern.permute.xlu0 0
    %814 = vperm.xlu0 %813, %v744
    %v815 = vpop.permute.xlu0 %814
    %818 = vset.pattern.permute.xlu0 0
    %819 = vperm.xlu0 %818, %v745
    %v820 = vpop.permute.xlu0 %819
    %823 = vset.pattern.permute.xlu0 0
    %824 = vperm.xlu0 %823, %v746
    %v825 = vpop.permute.xlu0 %824
    %828 = vset.pattern.permute.xlu0 0
    %829 = vperm.xlu0 %828, %v747
    %v830 = vpop.permute.xlu0 %829
    %833 = vset.pattern.permute.xlu0 0
    %834 = vperm.xlu0 %833, %v748
    %v835 = vpop.permute.xlu0 %834
    %838 = vset.pattern.permute.xlu0 0
    %839 = vperm.xlu0 %838, %v749
    %v840 = vpop.permute.xlu0 %839
    %843 = vset.pattern.permute.xlu0 0
    %844 = vperm.xlu0 %843, %v750
    %v845 = vpop.permute.xlu0 %844
    %848 = vset.pattern.permute.xlu0 0
    %849 = vperm.xlu0 %848, %v751
    %v850 = vpop.permute.xlu0 %849
    %853 = vset.pattern.permute.xlu0 0
    %854 = vperm.xlu0 %853, %v752
    %v855 = vpop.permute.xlu0 %854
    %858 = vset.pattern.permute.xlu0 0
    %859 = vperm.xlu0 %858, %v753
    %v860 = vpop.permute.xlu0 %859
    %863 = vset.pattern.permute.xlu0 0
    %864 = vperm.xlu0 %863, %v754
    %v865 = vpop.permute.xlu0 %864
    %868 = vset.pattern.permute.xlu0 0
    %869 = vperm.xlu0 %868, %v755
    %v870 = vpop.permute.xlu0 %869
    %873 = vset.pattern.permute.xlu0 0
    %874 = vperm.xlu0 %873, %v756
    %v875 = vpop.permute.xlu0 %874
    %878 = vset.pattern.permute.xlu0 0
    %879 = vperm.xlu0 %878, %v757
    %v880 = vpop.permute.xlu0 %879
    %883 = vset.pattern.permute.xlu0 0
    %884 = vperm.xlu0 %883, %v758
    %v885 = vpop.permute.xlu0 %884
    %888 = vset.pattern.permute.xlu0 0
    %889 = vperm.xlu0 %888, %v759
    %v890 = vpop.permute.xlu0 %889
    %893 = vset.pattern.permute.xlu0 0
    %894 = vperm.xlu0 %893, %v760
    %v895 = vpop.permute.xlu0 %894
    %898 = vset.pattern.permute.xlu0 0
    %899 = vperm.xlu0 %898, %v761
    %v900 = vpop.permute.xlu0 %899
    %903 = vset.pattern.permute.xlu0 0
    %904 = vperm.xlu0 %903, %v762
    %v905 = vpop.permute.xlu0 %904
    %908 = vset.pattern.permute.xlu0 0
    %909 = vperm.xlu0 %908, %v763
    %v910 = vpop.permute.xlu0 %909
    %913 = vset.pattern.permute.xlu0 0
    %914 = vperm.xlu0 %913, %v764
    %v915 = vpop.permute.xlu0 %914
    %918 = vset.pattern.permute.xlu0 0
    %919 = vperm.xlu0 %918, %v765
    %v920 = vpop.permute.xlu0 %919
    %923 = vset.pattern.permute.xlu0 0
    %924 = vperm.xlu0 %923, %v766
    %v925 = vpop.permute.xlu0 %924
    %927 = vmatprep.subr.mxu0 %v608
    %928 = vmatpush1.msra.mxu0 %v607
    %929 = vmatprep.subr.mxu0 %v610
    %930 = vmatpush1.msra.mxu0 %v609
    %931 = vmatprep.subr.mxu0 %v612
    %932 = vmatpush1.msra.mxu0 %v611
    %933 = vmatprep.subr.mxu0 %v614
    %934 = vmatpush1.msra.mxu0 %v613
    %935 = vmatprep.subr.mxu0 %v616
    %936 = vmatpush1.msra.mxu0 %v615
    %937 = vmatprep.subr.mxu0 %v618
    %938 = vmatpush1.msra.mxu0 %v617
    %939 = vmatprep.subr.mxu0 %v620
    %940 = vmatpush1.msra.mxu0 %v619
    %941 = vmatprep.subr.mxu0 %v622
    %942 = vmatpush1.msra.mxu0 %v621
    %943 = vmatprep.subr.mxu0 %v624
    %944 = vmatpush1.msra.mxu0 %v623
    %945 = vmatprep.subr.mxu0 %v626
    %946 = vmatpush1.msra.mxu0 %v625
    %947 = vmatprep.subr.mxu0 %v628
    %948 = vmatpush1.msra.mxu0 %v627
    %949 = vmatprep.subr.mxu0 %v630
    %950 = vmatpush1.msra.mxu0 %v629
    %951 = vmatprep.subr.mxu0 %v632
    %952 = vmatpush1.msra.mxu0 %v631
    %953 = vmatprep.subr.mxu0 %v634
    %954 = vmatpush1.msra.mxu0 %v633
    %955 = vmatprep.subr.mxu0 %v636
    %956 = vmatpush1.msra.mxu0 %v635
    %957 = vmatprep.subr.mxu0 %v638
    %958 = vmatpush1.msra.mxu0 %v637
    %959 = vmatprep.subr.mxu0 %v640
    %960 = vmatpush1.msra.mxu0 %v639
    %961 = vmatprep.subr.mxu0 %v642
    %962 = vmatpush1.msra.mxu0 %v641
    %963 = vmatprep.subr.mxu0 %v644
    %964 = vmatpush1.msra.mxu0 %v643
    %965 = vmatprep.subr.mxu0 %v646
    %966 = vmatpush1.msra.mxu0 %v645
    %967 = vmatprep.subr.mxu0 %v648
    %968 = vmatpush1.msra.mxu0 %v647
    %969 = vmatprep.subr.mxu0 %v650
    %970 = vmatpush1.msra.mxu0 %v649
    %971 = vmatprep.subr.mxu0 %v652
    %972 = vmatpush1.msra.mxu0 %v651
    %973 = vmatprep.subr.mxu0 %v654
    %974 = vmatpush1.msra.mxu0 %v653
    %975 = vmatprep.subr.mxu0 %v656
    %976 = vmatpush1.msra.mxu0 %v655
    %977 = vmatprep.subr.mxu0 %v658
    %978 = vmatpush1.msra.mxu0 %v657
    %979 = vmatprep.subr.mxu0 %v660
    %980 = vmatpush1.msra.mxu0 %v659
    %981 = vmatprep.subr.mxu0 %v662
    %982 = vmatpush1.msra.mxu0 %v661
    %983 = vmatprep.subr.mxu0 %v664
    %984 = vmatpush1.msra.mxu0 %v663
    %985 = vmatprep.subr.mxu0 %v666
    %986 = vmatpush1.msra.mxu0 %v665
    %987 = vmatprep.subr.mxu0 %v668
    %988 = vmatpush1.msra.mxu0 %v667
    %989 = vmatprep.subr.mxu0 %v670
    %990 = vmatpush1.msra.mxu0 %v669
    %991 = vmatprep.mubr.f32.mxu0 %v672
    %992 = vmatmul.mubr.f32.gmra.mrb[0].mxu0 %v671
    %v993 = vpop.f32.mrb[0].mxu0
    %v994 = vadd.f32 %v770, %v993
    %v995 = vpop.f32.mrb[0].mxu0
    %v996 = vadd.f32 %v770, %v995
    %997 = vmatprep.mubr.f32.mxu0 %v674
    %998 = vmatmul.mubr.f32.gmra.mrb[0].mxu0 %v673
    %v999 = vpop.f32.mrb[0].mxu0
    %v1000 = vadd.f32 %v775, %v999
    %v1001 = vpop.f32.mrb[0].mxu0
    %v1002 = vadd.f32 %v775, %v1001
    %1003 = vmatprep.mubr.f32.mxu0 %v676
    %1004 = vmatmul.mubr.f32.gmra.mrb[0].mxu0 %v675
    %v1005 = vpop.f32.mrb[0].mxu0
    %v1006 = vadd.f32 %v780, %v1005
    %v1007 = vpop.f32.mrb[0].mxu0
    %v1008 = vadd.f32 %v780, %v1007
    %1009 = vmatprep.mubr.f32.mxu0 %v678
    %1010 = vmatmul.mubr.f32.gmra.mrb[0].mxu0 %v677
    %v1011 = vpop.f32.mrb[0].mxu0
    %v1012 = vadd.f32 %v785, %v1011
    %v1013 = vpop.f32.mrb[0].mxu0
    %v1014 = vadd.f32 %v785, %v1013
    %1015 = vmatprep.mubr.f32.mxu0 %v680
    %1016 = vmatmul.mubr.f32.gmra.mrb[0].mxu0 %v679
    %v1017 = vpop.f32.mrb[0].mxu0
    %v1018 = vadd.f32 %v790, %v1017
    %v1019 = vpop.f32.mrb[0].mxu0
    %v1020 = vadd.f32 %v790, %v1019
    %1021 = vmatprep.mubr.f32.mxu0 %v682
    %1022 = vmatmul.mubr.f32.gmra.mrb[0].mxu0 %v681
    %v1023 = vpop.f32.mrb[0].mxu0
    %v1024 = vadd.f32 %v795, %v1023
    %v1025 = vpop.f32.mrb[0].mxu0
    %v1026 = vadd.f32 %v795, %v1025
    %1027 = vmatprep.mubr.f32.mxu0 %v684
    %1028 = vmatmul.mubr.f32.gmra.mrb[0].mxu0 %v683
    %v1029 = vpop.f32.mrb[0].mxu0
    %v1030 = vadd.f32 %v800, %v1029
    %v1031 = vpop.f32.mrb[0].mxu0
    %v1032 = vadd.f32 %v800, %v1031
    %1033 = vmatprep.mubr.f32.mxu0 %v686
    %1034 = vmatmul.mubr.f32.gmra.mrb[0].mxu0 %v685
    %v1035 = vpop.f32.mrb[0].mxu0
    %v1036 = vadd.f32 %v805, %v1035
    %v1037 = vpop.f32.mrb[0].mxu0
    %v1038 = vadd.f32 %v805, %v1037
    %1039 = vmatprep.mubr.f32.mxu0 %v688
    %1040 = vmatmul.mubr.f32.gmra.mrb[0].mxu0 %v687
    %v1041 = vpop.f32.mrb[0].mxu0
    %v1042 = vadd.f32 %v810, %v1041
    %v1043 = vpop.f32.mrb[0].mxu0
    %v1044 = vadd.f32 %v810, %v1043
    %1045 = vmatprep.mubr.f32.mxu0 %v690
    %1046 = vmatmul.mubr.f32.gmra.mrb[0].mxu0 %v689
    %v1047 = vpop.f32.mrb[0].mxu0
    %v1048 = vadd.f32 %v815, %v1047
    %v1049 = vpop.f32.mrb[0].mxu0
    %v1050 = vadd.f32 %v815, %v1049
    %1051 = vmatprep.mubr.f32.mxu0 %v692
    %1052 = vmatmul.mubr.f32.gmra.mrb[0].mxu0 %v691
    %v1053 = vpop.f32.mrb[0].mxu0
    %v1054 = vadd.f32 %v820, %v1053
    %v1055 = vpop.f32.mrb[0].mxu0
    %v1056 = vadd.f32 %v820, %v1055
    %1057 = vmatprep.mubr.f32.mxu0 %v694
    %1058 = vmatmul.mubr.f32.gmra.mrb[0].mxu0 %v693
    %v1059 = vpop.f32.mrb[0].mxu0
    %v1060 = vadd.f32 %v825, %v1059
    %v1061 = vpop.f32.mrb[0].mxu0
    %v1062 = vadd.f32 %v825, %v1061
    %1063 = vmatprep.mubr.f32.mxu0 %v696
    %1064 = vmatmul.mubr.f32.gmra.mrb[0].mxu0 %v695
    %v1065 = vpop.f32.mrb[0].mxu0
    %v1066 = vadd.f32 %v830, %v1065
    %v1067 = vpop.f32.mrb[0].mxu0
    %v1068 = vadd.f32 %v830, %v1067
    %1069 = vmatprep.mubr.f32.mxu0 %v698
    %1070 = vmatmul.mubr.f32.gmra.mrb[0].mxu0 %v697
    %v1071 = vpop.f32.mrb[0].mxu0
    %v1072 = vadd.f32 %v835, %v1071
    %v1073 = vpop.f32.mrb[0].mxu0
    %v1074 = vadd.f32 %v835, %v1073
    %1075 = vmatprep.mubr.f32.mxu0 %v700
    %1076 = vmatmul.mubr.f32.gmra.mrb[0].mxu0 %v699
    %v1077 = vpop.f32.mrb[0].mxu0
    %v1078 = vadd.f32 %v840, %v1077
    %v1079 = vpop.f32.mrb[0].mxu0
    %v1080 = vadd.f32 %v840, %v1079
    %1081 = vmatprep.mubr.f32.mxu0 %v702
    %1082 = vmatmul.mubr.f32.gmra.mrb[0].mxu0 %v701
    %v1083 = vpop.f32.mrb[0].mxu0
    %v1084 = vadd.f32 %v845, %v1083
    %v1085 = vpop.f32.mrb[0].mxu0
    %v1086 = vadd.f32 %v845, %v1085
    %1087 = vmatprep.mubr.f32.mxu0 %v704
    %1088 = vmatmul.mubr.f32.gmra.mrb[0].mxu0 %v703
    %v1089 = vpop.f32.mrb[0].mxu0
    %v1090 = vadd.f32 %v850, %v1089
    %v1091 = vpop.f32.mrb[0].mxu0
    %v1092 = vadd.f32 %v850, %v1091
    %1093 = vmatprep.mubr.f32.mxu0 %v706
    %1094 = vmatmul.mubr.f32.gmra.mrb[0].mxu0 %v705
    %v1095 = vpop.f32.mrb[0].mxu0
    %v1096 = vadd.f32 %v855, %v1095
    %v1097 = vpop.f32.mrb[0].mxu0
    %v1098 = vadd.f32 %v855, %v1097
    %1099 = vmatprep.mubr.f32.mxu0 %v708
    %1100 = vmatmul.mubr.f32.gmra.mrb[0].mxu0 %v707
    %v1101 = vpop.f32.mrb[0].mxu0
    %v1102 = vadd.f32 %v860, %v1101
    %v1103 = vpop.f32.mrb[0].mxu0
    %v1104 = vadd.f32 %v860, %v1103
    %1105 = vmatprep.mubr.f32.mxu0 %v710
    %1106 = vmatmul.mubr.f32.gmra.mrb[0].mxu0 %v709
    %v1107 = vpop.f32.mrb[0].mxu0
    %v1108 = vadd.f32 %v865, %v1107
    %v1109 = vpop.f32.mrb[0].mxu0
    %v1110 = vadd.f32 %v865, %v1109
    %1111 = vmatprep.mubr.f32.mxu0 %v712
    %1112 = vmatmul.mubr.f32.gmra.mrb[0].mxu0 %v711
    %v1113 = vpop.f32.mrb[0].mxu0
    %v1114 = vadd.f32 %v870, %v1113
    %v1115 = vpop.f32.mrb[0].mxu0
    %v1116 = vadd.f32 %v870, %v1115
    %1117 = vmatprep.mubr.f32.mxu0 %v714
    %1118 = vmatmul.mubr.f32.gmra.mrb[0].mxu0 %v713
    %v1119 = vpop.f32.mrb[0].mxu0
    %v1120 = vadd.f32 %v875, %v1119
    %v1121 = vpop.f32.mrb[0].mxu0
    %v1122 = vadd.f32 %v875, %v1121
    %1123 = vmatprep.mubr.f32.mxu0 %v716
    %1124 = vmatmul.mubr.f32.gmra.mrb[0].mxu0 %v715
    %v1125 = vpop.f32.mrb[0].mxu0
    %v1126 = vadd.f32 %v880, %v1125
    %v1127 = vpop.f32.mrb[0].mxu0
    %v1128 = vadd.f32 %v880, %v1127
    %1129 = vmatprep.mubr.f32.mxu0 %v718
    %1130 = vmatmul.mubr.f32.gmra.mrb[0].mxu0 %v717
    %v1131 = vpop.f32.mrb[0].mxu0
    %v1132 = vadd.f32 %v885, %v1131
    %v1133 = vpop.f32.mrb[0].mxu0
    %v1134 = vadd.f32 %v885, %v1133
    %1135 = vmatprep.mubr.f32.mxu0 %v720
    %1136 = vmatmul.mubr.f32.gmra.mrb[0].mxu0 %v719
    %v1137 = vpop.f32.mrb[0].mxu0
    %v1138 = vadd.f32 %v890, %v1137
    %v1139 = vpop.f32.mrb[0].mxu0
    %v1140 = vadd.f32 %v890, %v1139
    %1141 = vmatprep.mubr.f32.mxu0 %v722
    %1142 = vmatmul.mubr.f32.gmra.mrb[0].mxu0 %v721
    %v1143 = vpop.f32.mrb[0].mxu0
    %v1144 = vadd.f32 %v895, %v1143
    %v1145 = vpop.f32.mrb[0].mxu0
    %v1146 = vadd.f32 %v895, %v1145
    %1147 = vmatprep.mubr.f32.mxu0 %v724
    %1148 = vmatmul.mubr.f32.gmra.mrb[0].mxu0 %v723
    %v1149 = vpop.f32.mrb[0].mxu0
    %v1150 = vadd.f32 %v900, %v1149
    %v1151 = vpop.f32.mrb[0].mxu0
    %v1152 = vadd.f32 %v900, %v1151
    %1153 = vmatprep.mubr.f32.mxu0 %v726
    %1154 = vmatmul.mubr.f32.gmra.mrb[0].mxu0 %v725
    %v1155 = vpop.f32.mrb[0].mxu0
    %v1156 = vadd.f32 %v905, %v1155
    %v1157 = vpop.f32.mrb[0].mxu0
    %v1158 = vadd.f32 %v905, %v1157
    %1159 = vmatprep.mubr.f32.mxu0 %v728
    %1160 = vmatmul.mubr.f32.gmra.mrb[0].mxu0 %v727
    %v1161 = vpop.f32.mrb[0].mxu0
    %v1162 = vadd.f32 %v910, %v1161
    %v1163 = vpop.f32.mrb[0].mxu0
    %v1164 = vadd.f32 %v910, %v1163
    %1165 = vmatprep.mubr.f32.mxu0 %v730
    %1166 = vmatmul.mubr.f32.gmra.mrb[0].mxu0 %v729
    %v1167 = vpop.f32.mrb[0].mxu0
    %v1168 = vadd.f32 %v915, %v1167
    %v1169 = vpop.f32.mrb[0].mxu0
    %v1170 = vadd.f32 %v915, %v1169
    %1171 = vmatprep.mubr.f32.mxu0 %v732
    %1172 = vmatmul.mubr.f32.gmra.mrb[0].mxu0 %v731
    %v1173 = vpop.f32.mrb[0].mxu0
    %v1174 = vadd.f32 %v920, %v1173
    %v1175 = vpop.f32.mrb[0].mxu0
    %v1176 = vadd.f32 %v920, %v1175
    %1177 = vmatprep.mubr.f32.mxu0 %v734
    %1178 = vmatmul.mubr.f32.gmra.mrb[0].mxu0 %v733
    %v1179 = vpop.f32.mrb[0].mxu0
    %v1180 = vadd.f32 %v925, %v1179
    %v1181 = vpop.f32.mrb[0].mxu0
    %v1182 = vadd.f32 %v925, %v1181
    %1183 = vdwg.mxu0
    %v1184 = vmax.f32 %v994, 0.0
    %v1185 = vmax.f32 %v996, 0.0
    %v1186 = vmax.f32 %v1000, 0.0
    %v1187 = vmax.f32 %v1002, 0.0
    %v1188 = vmax.f32 %v1006, 0.0
    %v1189 = vmax.f32 %v1008, 0.0
    %v1190 = vmax.f32 %v1012, 0.0
    %v1191 = vmax.f32 %v1014, 0.0
    %v1192 = vmax.f32 %v1018, 0.0
    %v1193 = vmax.f32 %v1020, 0.0
    %v1194 = vmax.f32 %v1024, 0.0
    %v1195 = vmax.f32 %v1026, 0.0
    %v1196 = vmax.f32 %v1030, 0.0
    %v1197 = vmax.f32 %v1032, 0.0
    %v1198 = vmax.f32 %v1036, 0.0
    %v1199 = vmax.f32 %v1038, 0.0
    %v1200 = vmax.f32 %v1042, 0.0
    %v1201 = vmax.f32 %v1044, 0.0
    %v1202 = vmax.f32 %v1048, 0.0
    %v1203 = vmax.f32 %v1050, 0.0
    %v1204 = vmax.f32 %v1054, 0.0
    %v1205 = vmax.f32 %v1056, 0.0
    %v1206 = vmax.f32 %v1060, 0.0
    %v1207 = vmax.f32 %v1062, 0.0
    %v1208 = vmax.f32 %v1066, 0.0
    %v1209 = vmax.f32 %v1068, 0.0
    %v1210 = vmax.f32 %v1072, 0.0
    %v1211 = vmax.f32 %v1074, 0.0
    %v1212 = vmax.f32 %v1078, 0.0
    %v1213 = vmax.f32 %v1080, 0.0
    %v1214 = vmax.f32 %v1084, 0.0
    %v1215 = vmax.f32 %v1086, 0.0
    %v1216 = vmax.f32 %v1090, 0.0
    %v1217 = vmax.f32 %v1092, 0.0
    %v1218 = vmax.f32 %v1096, 0.0
    %v1219 = vmax.f32 %v1098, 0.0
    %v1220 = vmax.f32 %v1102, 0.0
    %v1221 = vmax.f32 %v1104, 0.0
    %v1222 = vmax.f32 %v1108, 0.0
    %v1223 = vmax.f32 %v1110, 0.0
    %v1224 = vmax.f32 %v1114, 0.0
    %v1225 = vmax.f32 %v1116, 0.0
    %v1226 = vmax.f32 %v1120, 0.0
    %v1227 = vmax.f32 %v1122, 0.0
    %v1228 = vmax.f32 %v1126, 0.0
    %v1229 = vmax.f32 %v1128, 0.0
    %v1230 = vmax.f32 %v1132, 0.0
    %v1231 = vmax.f32 %v1134, 0.0
    %v1232 = vmax.f32 %v1138, 0.0
    %v1233 = vmax.f32 %v1140, 0.0
    %v1234 = vmax.f32 %v1144, 0.0
    %v1235 = vmax.f32 %v1146, 0.0
    %v1236 = vmax.f32 %v1150, 0.0
    %v1237 = vmax.f32 %v1152, 0.0
    %v1238 = vmax.f32 %v1156, 0.0
    %v1239 = vmax.f32 %v1158, 0.0
    %v1240 = vmax.f32 %v1162, 0.0
    %v1241 = vmax.f32 %v1164, 0.0
    %v1242 = vmax.f32 %v1168, 0.0
    %v1243 = vmax.f32 %v1170, 0.0
    %v1244 = vmax.f32 %v1174, 0.0
    %v1245 = vmax.f32 %v1176, 0.0
    %v1246 = vmax.f32 %v1180, 0.0
    %v1247 = vmax.f32 %v1182, 0.0
    %s1248 = scalar_lea.vmem %s3, 512
    %v1249 = vld [vmem:[%s1248] sm:$0xff]
    %v1250 = vld [vmem:[%s1248 + $0x8] sm:$0xff]
    %v1251 = vld [vmem:[%s1248 + $0x10] sm:$0xff]
    %v1252 = vld [vmem:[%s1248 + $0x18] sm:$0xff]
    %v1253 = vld [vmem:[%s1248 + $0x20] sm:$0xff]
    %v1254 = vld [vmem:[%s1248 + $0x28] sm:$0xff]
    %v1255 = vld [vmem:[%s1248 + $0x30] sm:$0xff]
    %v1256 = vld [vmem:[%s1248 + $0x38] sm:$0xff]
    %v1257 = vld [vmem:[%s1248 + $0x40] sm:$0xff]
    %v1258 = vld [vmem:[%s1248 + $0x48] sm:$0xff]
    %v1259 = vld [vmem:[%s1248 + $0x50] sm:$0xff]
    %v1260 = vld [vmem:[%s1248 + $0x58] sm:$0xff]
    %v1261 = vld [vmem:[%s1248 + $0x60] sm:$0xff]
    %v1262 = vld [vmem:[%s1248 + $0x68] sm:$0xff]
    %v1263 = vld [vmem:[%s1248 + $0x70] sm:$0xff]
    %v1264 = vld [vmem:[%s1248 + $0x78] sm:$0xff]
    %v1265 = vld [vmem:[%s1248 + $0x80] sm:$0xff]
    %v1266 = vld [vmem:[%s1248 + $0x88] sm:$0xff]
    %v1267 = vld [vmem:[%s1248 + $0x90] sm:$0xff]
    %v1268 = vld [vmem:[%s1248 + $0x98] sm:$0xff]
    %v1269 = vld [vmem:[%s1248 + $0xa0] sm:$0xff]
    %v1270 = vld [vmem:[%s1248 + $0xa8] sm:$0xff]
    %v1271 = vld [vmem:[%s1248 + $0xb0] sm:$0xff]
    %v1272 = vld [vmem:[%s1248 + $0xb8] sm:$0xff]
    %v1273 = vld [vmem:[%s1248 + $0xc0] sm:$0xff]
    %v1274 = vld [vmem:[%s1248 + $0xc8] sm:$0xff]
    %v1275 = vld [vmem:[%s1248 + $0xd0] sm:$0xff]
    %v1276 = vld [vmem:[%s1248 + $0xd8] sm:$0xff]
    %v1277 = vld [vmem:[%s1248 + $0xe0] sm:$0xff]
    %v1278 = vld [vmem:[%s1248 + $0xe8] sm:$0xff]
    %v1279 = vld [vmem:[%s1248 + $0xf0] sm:$0xff]
    %v1280 = vld [vmem:[%s1248 + $0xf8] sm:$0xff]
    %v1281 = vld [vmem:[%s1248 + $0x100] sm:$0xff]
    %v1282 = vld [vmem:[%s1248 + $0x108] sm:$0xff]
    %v1283 = vld [vmem:[%s1248 + $0x110] sm:$0xff]
    %v1284 = vld [vmem:[%s1248 + $0x118] sm:$0xff]
    %v1285 = vld [vmem:[%s1248 + $0x120] sm:$0xff]
    %v1286 = vld [vmem:[%s1248 + $0x128] sm:$0xff]
    %v1287 = vld [vmem:[%s1248 + $0x130] sm:$0xff]
    %v1288 = vld [vmem:[%s1248 + $0x138] sm:$0xff]
    %v1289 = vld [vmem:[%s1248 + $0x140] sm:$0xff]
    %v1290 = vld [vmem:[%s1248 + $0x148] sm:$0xff]
    %v1291 = vld [vmem:[%s1248 + $0x150] sm:$0xff]
    %v1292 = vld [vmem:[%s1248 + $0x158] sm:$0xff]
    %v1293 = vld [vmem:[%s1248 + $0x160] sm:$0xff]
    %v1294 = vld [vmem:[%s1248 + $0x168] sm:$0xff]
    %v1295 = vld [vmem:[%s1248 + $0x170] sm:$0xff]
    %v1296 = vld [vmem:[%s1248 + $0x178] sm:$0xff]
    %v1297 = vld [vmem:[%s1248 + $0x180] sm:$0xff]
    %v1298 = vld [vmem:[%s1248 + $0x188] sm:$0xff]
    %v1299 = vld [vmem:[%s1248 + $0x190] sm:$0xff]
    %v1300 = vld [vmem:[%s1248 + $0x198] sm:$0xff]
    %v1301 = vld [vmem:[%s1248 + $0x1a0] sm:$0xff]
    %v1302 = vld [vmem:[%s1248 + $0x1a8] sm:$0xff]
    %v1303 = vld [vmem:[%s1248 + $0x1b0] sm:$0xff]
    %v1304 = vld [vmem:[%s1248 + $0x1b8] sm:$0xff]
    %v1305 = vld [vmem:[%s1248 + $0x1c0] sm:$0xff]
    %v1306 = vld [vmem:[%s1248 + $0x1c8] sm:$0xff]
    %v1307 = vld [vmem:[%s1248 + $0x1d0] sm:$0xff]
    %v1308 = vld [vmem:[%s1248 + $0x1d8] sm:$0xff]
    %v1309 = vld [vmem:[%s1248 + $0x1e0] sm:$0xff]
    %v1310 = vld [vmem:[%s1248 + $0x1e8] sm:$0xff]
    %v1311 = vld [vmem:[%s1248 + $0x1f0] sm:$0xff]
    %v1312 = vld [vmem:[%s1248 + $0x1f8] sm:$0xff]
    %s1313 = scalar_lea.vmem %s4, 256
    %v1314 = vld [vmem:[%s1313] sm:$0xff]
    %v1315 = vld [vmem:[%s1313 + $0x8] sm:$0xff]
    %v1316 = vld [vmem:[%s1313 + $0x10] sm:$0xff]
    %v1317 = vld [vmem:[%s1313 + $0x18] sm:$0xff]
    %v1318 = vld [vmem:[%s1313 + $0x20] sm:$0xff]
    %v1319 = vld [vmem:[%s1313 + $0x28] sm:$0xff]
    %v1320 = vld [vmem:[%s1313 + $0x30] sm:$0xff]
    %v1321 = vld [vmem:[%s1313 + $0x38] sm:$0xff]
    %v1322 = vld [vmem:[%s1313 + $0x40] sm:$0xff]
    %v1323 = vld [vmem:[%s1313 + $0x48] sm:$0xff]
    %v1324 = vld [vmem:[%s1313 + $0x50] sm:$0xff]
    %v1325 = vld [vmem:[%s1313 + $0x58] sm:$0xff]
    %v1326 = vld [vmem:[%s1313 + $0x60] sm:$0xff]
    %v1327 = vld [vmem:[%s1313 + $0x68] sm:$0xff]
    %v1328 = vld [vmem:[%s1313 + $0x70] sm:$0xff]
    %v1329 = vld [vmem:[%s1313 + $0x78] sm:$0xff]
    %v1330 = vld [vmem:[%s1313 + $0x80] sm:$0xff]
    %v1331 = vld [vmem:[%s1313 + $0x88] sm:$0xff]
    %v1332 = vld [vmem:[%s1313 + $0x90] sm:$0xff]
    %v1333 = vld [vmem:[%s1313 + $0x98] sm:$0xff]
    %v1334 = vld [vmem:[%s1313 + $0xa0] sm:$0xff]
    %v1335 = vld [vmem:[%s1313 + $0xa8] sm:$0xff]
    %v1336 = vld [vmem:[%s1313 + $0xb0] sm:$0xff]
    %v1337 = vld [vmem:[%s1313 + $0xb8] sm:$0xff]
    %v1338 = vld [vmem:[%s1313 + $0xc0] sm:$0xff]
    %v1339 = vld [vmem:[%s1313 + $0xc8] sm:$0xff]
    %v1340 = vld [vmem:[%s1313 + $0xd0] sm:$0xff]
    %v1341 = vld [vmem:[%s1313 + $0xd8] sm:$0xff]
    %v1342 = vld [vmem:[%s1313 + $0xe0] sm:$0xff]
    %v1343 = vld [vmem:[%s1313 + $0xe8] sm:$0xff]
    %v1344 = vld [vmem:[%s1313 + $0xf0] sm:$0xff]
    %v1345 = vld [vmem:[%s1313 + $0xf8] sm:$0xff]
    %1347 = vset.pattern.permute.xlu0 0
    %1348 = vperm.xlu0 %1347, %v1314
    %v1349 = vpop.permute.xlu0 %1348
    %1352 = vset.pattern.permute.xlu0 0
    %1353 = vperm.xlu0 %1352, %v1315
    %v1354 = vpop.permute.xlu0 %1353
    %1357 = vset.pattern.permute.xlu0 0
    %1358 = vperm.xlu0 %1357, %v1316
    %v1359 = vpop.permute.xlu0 %1358
    %1362 = vset.pattern.permute.xlu0 0
    %1363 = vperm.xlu0 %1362, %v1317
    %v1364 = vpop.permute.xlu0 %1363
    %1367 = vset.pattern.permute.xlu0 0
    %1368 = vperm.xlu0 %1367, %v1318
    %v1369 = vpop.permute.xlu0 %1368
    %1372 = vset.pattern.permute.xlu0 0
    %1373 = vperm.xlu0 %1372, %v1319
    %v1374 = vpop.permute.xlu0 %1373
    %1377 = vset.pattern.permute.xlu0 0
    %1378 = vperm.xlu0 %1377, %v1320
    %v1379 = vpop.permute.xlu0 %1378
    %1382 = vset.pattern.permute.xlu0 0
    %1383 = vperm.xlu0 %1382, %v1321
    %v1384 = vpop.permute.xlu0 %1383
    %1387 = vset.pattern.permute.xlu0 0
    %1388 = vperm.xlu0 %1387, %v1322
    %v1389 = vpop.permute.xlu0 %1388
    %1392 = vset.pattern.permute.xlu0 0
    %1393 = vperm.xlu0 %1392, %v1323
    %v1394 = vpop.permute.xlu0 %1393
    %1397 = vset.pattern.permute.xlu0 0
    %1398 = vperm.xlu0 %1397, %v1324
    %v1399 = vpop.permute.xlu0 %1398
    %1402 = vset.pattern.permute.xlu0 0
    %1403 = vperm.xlu0 %1402, %v1325
    %v1404 = vpop.permute.xlu0 %1403
    %1407 = vset.pattern.permute.xlu0 0
    %1408 = vperm.xlu0 %1407, %v1326
    %v1409 = vpop.permute.xlu0 %1408
    %1412 = vset.pattern.permute.xlu0 0
    %1413 = vperm.xlu0 %1412, %v1327
    %v1414 = vpop.permute.xlu0 %1413
    %1417 = vset.pattern.permute.xlu0 0
    %1418 = vperm.xlu0 %1417, %v1328
    %v1419 = vpop.permute.xlu0 %1418
    %1422 = vset.pattern.permute.xlu0 0
    %1423 = vperm.xlu0 %1422, %v1329
    %v1424 = vpop.permute.xlu0 %1423
    %1427 = vset.pattern.permute.xlu0 0
    %1428 = vperm.xlu0 %1427, %v1330
    %v1429 = vpop.permute.xlu0 %1428
    %1432 = vset.pattern.permute.xlu0 0
    %1433 = vperm.xlu0 %1432, %v1331
    %v1434 = vpop.permute.xlu0 %1433
    %1437 = vset.pattern.permute.xlu0 0
    %1438 = vperm.xlu0 %1437, %v1332
    %v1439 = vpop.permute.xlu0 %1438
    %1442 = vset.pattern.permute.xlu0 0
    %1443 = vperm.xlu0 %1442, %v1333
    %v1444 = vpop.permute.xlu0 %1443
    %1447 = vset.pattern.permute.xlu0 0
    %1448 = vperm.xlu0 %1447, %v1334
    %v1449 = vpop.permute.xlu0 %1448
    %1452 = vset.pattern.permute.xlu0 0
    %1453 = vperm.xlu0 %1452, %v1335
    %v1454 = vpop.permute.xlu0 %1453
    %1457 = vset.pattern.permute.xlu0 0
    %1458 = vperm.xlu0 %1457, %v1336
    %v1459 = vpop.permute.xlu0 %1458
    %1462 = vset.pattern.permute.xlu0 0
    %1463 = vperm.xlu0 %1462, %v1337
    %v1464 = vpop.permute.xlu0 %1463
    %1467 = vset.pattern.permute.xlu0 0
    %1468 = vperm.xlu0 %1467, %v1338
    %v1469 = vpop.permute.xlu0 %1468
    %1472 = vset.pattern.permute.xlu0 0
    %1473 = vperm.xlu0 %1472, %v1339
    %v1474 = vpop.permute.xlu0 %1473
    %1477 = vset.pattern.permute.xlu0 0
    %1478 = vperm.xlu0 %1477, %v1340
    %v1479 = vpop.permute.xlu0 %1478
    %1482 = vset.pattern.permute.xlu0 0
    %1483 = vperm.xlu0 %1482, %v1341
    %v1484 = vpop.permute.xlu0 %1483
    %1487 = vset.pattern.permute.xlu0 0
    %1488 = vperm.xlu0 %1487, %v1342
    %v1489 = vpop.permute.xlu0 %1488
    %1492 = vset.pattern.permute.xlu0 0
    %1493 = vperm.xlu0 %1492, %v1343
    %v1494 = vpop.permute.xlu0 %1493
    %1497 = vset.pattern.permute.xlu0 0
    %1498 = vperm.xlu0 %1497, %v1344
    %v1499 = vpop.permute.xlu0 %1498
    %1502 = vset.pattern.permute.xlu0 0
    %1503 = vperm.xlu0 %1502, %v1345
    %v1504 = vpop.permute.xlu0 %1503
    %1506 = vmatprep.subr.mxu0 %v1185
    %1507 = vmatpush1.msra.mxu0 %v1184
    %1508 = vmatprep.subr.mxu0 %v1187
    %1509 = vmatpush1.msra.mxu0 %v1186
    %1510 = vmatprep.subr.mxu0 %v1189
    %1511 = vmatpush1.msra.mxu0 %v1188
    %1512 = vmatprep.subr.mxu0 %v1191
    %1513 = vmatpush1.msra.mxu0 %v1190
    %1514 = vmatprep.subr.mxu0 %v1193
    %1515 = vmatpush1.msra.mxu0 %v1192
    %1516 = vmatprep.subr.mxu0 %v1195
    %1517 = vmatpush1.msra.mxu0 %v1194
    %1518 = vmatprep.subr.mxu0 %v1197
    %1519 = vmatpush1.msra.mxu0 %v1196
    %1520 = vmatprep.subr.mxu0 %v1199
    %1521 = vmatpush1.msra.mxu0 %v1198
    %1522 = vmatprep.subr.mxu0 %v1201
    %1523 = vmatpush1.msra.mxu0 %v1200
    %1524 = vmatprep.subr.mxu0 %v1203
    %1525 = vmatpush1.msra.mxu0 %v1202
    %1526 = vmatprep.subr.mxu0 %v1205
    %1527 = vmatpush1.msra.mxu0 %v1204
    %1528 = vmatprep.subr.mxu0 %v1207
    %1529 = vmatpush1.msra.mxu0 %v1206
    %1530 = vmatprep.subr.mxu0 %v1209
    %1531 = vmatpush1.msra.mxu0 %v1208
    %1532 = vmatprep.subr.mxu0 %v1211
    %1533 = vmatpush1.msra.mxu0 %v1210
    %1534 = vmatprep.subr.mxu0 %v1213
    %1535 = vmatpush1.msra.mxu0 %v1212
    %1536 = vmatprep.subr.mxu0 %v1215
    %1537 = vmatpush1.msra.mxu0 %v1214
    %1538 = vmatprep.subr.mxu0 %v1217
    %1539 = vmatpush1.msra.mxu0 %v1216
    %1540 = vmatprep.subr.mxu0 %v1219
    %1541 = vmatpush1.msra.mxu0 %v1218
    %1542 = vmatprep.subr.mxu0 %v1221
    %1543 = vmatpush1.msra.mxu0 %v1220
    %1544 = vmatprep.subr.mxu0 %v1223
    %1545 = vmatpush1.msra.mxu0 %v1222
    %1546 = vmatprep.subr.mxu0 %v1225
    %1547 = vmatpush1.msra.mxu0 %v1224
    %1548 = vmatprep.subr.mxu0 %v1227
    %1549 = vmatpush1.msra.mxu0 %v1226
    %1550 = vmatprep.subr.mxu0 %v1229
    %1551 = vmatpush1.msra.mxu0 %v1228
    %1552 = vmatprep.subr.mxu0 %v1231
    %1553 = vmatpush1.msra.mxu0 %v1230
    %1554 = vmatprep.subr.mxu0 %v1233
    %1555 = vmatpush1.msra.mxu0 %v1232
    %1556 = vmatprep.subr.mxu0 %v1235
    %1557 = vmatpush1.msra.mxu0 %v1234
    %1558 = vmatprep.subr.mxu0 %v1237
    %1559 = vmatpush1.msra.mxu0 %v1236
    %1560 = vmatprep.subr.mxu0 %v1239
    %1561 = vmatpush1.msra.mxu0 %v1238
    %1562 = vmatprep.subr.mxu0 %v1241
    %1563 = vmatpush1.msra.mxu0 %v1240
    %1564 = vmatprep.subr.mxu0 %v1243
    %1565 = vmatpush1.msra.mxu0 %v1242
    %1566 = vmatprep.subr.mxu0 %v1245
    %1567 = vmatpush1.msra.mxu0 %v1244
    %1568 = vmatprep.subr.mxu0 %v1247
    %1569 = vmatpush1.msra.mxu0 %v1246
    %1570 = vmatprep.mubr.f32.mxu0 %v1250
    %1571 = vmatmul.mubr.f32.gmra.mrb[0].mxu0 %v1249
    %v1572 = vpop.f32.mrb[0].mxu0
    %v1573 = vadd.f32 %v1349, %v1572
    %v1574 = vpop.f32.mrb[0].mxu0
    %v1575 = vadd.f32 %v1349, %v1574
    %1576 = vmatprep.mubr.f32.mxu0 %v1252
    %1577 = vmatmul.mubr.f32.gmra.mrb[0].mxu0 %v1251
    %v1578 = vpop.f32.mrb[0].mxu0
    %v1579 = vadd.f32 %v1354, %v1578
    %v1580 = vpop.f32.mrb[0].mxu0
    %v1581 = vadd.f32 %v1354, %v1580
    %1582 = vmatprep.mubr.f32.mxu0 %v1254
    %1583 = vmatmul.mubr.f32.gmra.mrb[0].mxu0 %v1253
    %v1584 = vpop.f32.mrb[0].mxu0
    %v1585 = vadd.f32 %v1359, %v1584
    %v1586 = vpop.f32.mrb[0].mxu0
    %v1587 = vadd.f32 %v1359, %v1586
    %1588 = vmatprep.mubr.f32.mxu0 %v1256
    %1589 = vmatmul.mubr.f32.gmra.mrb[0].mxu0 %v1255
    %v1590 = vpop.f32.mrb[0].mxu0
    %v1591 = vadd.f32 %v1364, %v1590
    %v1592 = vpop.f32.mrb[0].mxu0
    %v1593 = vadd.f32 %v1364, %v1592
    %1594 = vmatprep.mubr.f32.mxu0 %v1258
    %1595 = vmatmul.mubr.f32.gmra.mrb[0].mxu0 %v1257
    %v1596 = vpop.f32.mrb[0].mxu0
    %v1597 = vadd.f32 %v1369, %v1596
    %v1598 = vpop.f32.mrb[0].mxu0
    %v1599 = vadd.f32 %v1369, %v1598
    %1600 = vmatprep.mubr.f32.mxu0 %v1260
    %1601 = vmatmul.mubr.f32.gmra.mrb[0].mxu0 %v1259
    %v1602 = vpop.f32.mrb[0].mxu0
    %v1603 = vadd.f32 %v1374, %v1602
    %v1604 = vpop.f32.mrb[0].mxu0
    %v1605 = vadd.f32 %v1374, %v1604
    %1606 = vmatprep.mubr.f32.mxu0 %v1262
    %1607 = vmatmul.mubr.f32.gmra.mrb[0].mxu0 %v1261
    %v1608 = vpop.f32.mrb[0].mxu0
    %v1609 = vadd.f32 %v1379, %v1608
    %v1610 = vpop.f32.mrb[0].mxu0
    %v1611 = vadd.f32 %v1379, %v1610
    %1612 = vmatprep.mubr.f32.mxu0 %v1264
    %1613 = vmatmul.mubr.f32.gmra.mrb[0].mxu0 %v1263
    %v1614 = vpop.f32.mrb[0].mxu0
    %v1615 = vadd.f32 %v1384, %v1614
    %v1616 = vpop.f32.mrb[0].mxu0
    %v1617 = vadd.f32 %v1384, %v1616
    %1618 = vmatprep.mubr.f32.mxu0 %v1266
    %1619 = vmatmul.mubr.f32.gmra.mrb[0].mxu0 %v1265
    %v1620 = vpop.f32.mrb[0].mxu0
    %v1621 = vadd.f32 %v1389, %v1620
    %v1622 = vpop.f32.mrb[0].mxu0
    %v1623 = vadd.f32 %v1389, %v1622
    %1624 = vmatprep.mubr.f32.mxu0 %v1268
    %1625 = vmatmul.mubr.f32.gmra.mrb[0].mxu0 %v1267
    %v1626 = vpop.f32.mrb[0].mxu0
    %v1627 = vadd.f32 %v1394, %v1626
    %v1628 = vpop.f32.mrb[0].mxu0
    %v1629 = vadd.f32 %v1394, %v1628
    %1630 = vmatprep.mubr.f32.mxu0 %v1270
    %1631 = vmatmul.mubr.f32.gmra.mrb[0].mxu0 %v1269
    %v1632 = vpop.f32.mrb[0].mxu0
    %v1633 = vadd.f32 %v1399, %v1632
    %v1634 = vpop.f32.mrb[0].mxu0
    %v1635 = vadd.f32 %v1399, %v1634
    %1636 = vmatprep.mubr.f32.mxu0 %v1272
    %1637 = vmatmul.mubr.f32.gmra.mrb[0].mxu0 %v1271
    %v1638 = vpop.f32.mrb[0].mxu0
    %v1639 = vadd.f32 %v1404, %v1638
    %v1640 = vpop.f32.mrb[0].mxu0
    %v1641 = vadd.f32 %v1404, %v1640
    %1642 = vmatprep.mubr.f32.mxu0 %v1274
    %1643 = vmatmul.mubr.f32.gmra.mrb[0].mxu0 %v1273
    %v1644 = vpop.f32.mrb[0].mxu0
    %v1645 = vadd.f32 %v1409, %v1644
    %v1646 = vpop.f32.mrb[0].mxu0
    %v1647 = vadd.f32 %v1409, %v1646
    %1648 = vmatprep.mubr.f32.mxu0 %v1276
    %1649 = vmatmul.mubr.f32.gmra.mrb[0].mxu0 %v1275
    %v1650 = vpop.f32.mrb[0].mxu0
    %v1651 = vadd.f32 %v1414, %v1650
    %v1652 = vpop.f32.mrb[0].mxu0
    %v1653 = vadd.f32 %v1414, %v1652
    %1654 = vmatprep.mubr.f32.mxu0 %v1278
    %1655 = vmatmul.mubr.f32.gmra.mrb[0].mxu0 %v1277
    %v1656 = vpop.f32.mrb[0].mxu0
    %v1657 = vadd.f32 %v1419, %v1656
    %v1658 = vpop.f32.mrb[0].mxu0
    %v1659 = vadd.f32 %v1419, %v1658
    %1660 = vmatprep.mubr.f32.mxu0 %v1280
    %1661 = vmatmul.mubr.f32.gmra.mrb[0].mxu0 %v1279
    %v1662 = vpop.f32.mrb[0].mxu0
    %v1663 = vadd.f32 %v1424, %v1662
    %v1664 = vpop.f32.mrb[0].mxu0
    %v1665 = vadd.f32 %v1424, %v1664
    %1666 = vmatprep.mubr.f32.mxu0 %v1282
    %1667 = vmatmul.mubr.f32.gmra.mrb[0].mxu0 %v1281
    %v1668 = vpop.f32.mrb[0].mxu0
    %v1669 = vadd.f32 %v1429, %v1668
    %v1670 = vpop.f32.mrb[0].mxu0
    %v1671 = vadd.f32 %v1429, %v1670
    %1672 = vmatprep.mubr.f32.mxu0 %v1284
    %1673 = vmatmul.mubr.f32.gmra.mrb[0].mxu0 %v1283
    %v1674 = vpop.f32.mrb[0].mxu0
    %v1675 = vadd.f32 %v1434, %v1674
    %v1676 = vpop.f32.mrb[0].mxu0
    %v1677 = vadd.f32 %v1434, %v1676
    %1678 = vmatprep.mubr.f32.mxu0 %v1286
    %1679 = vmatmul.mubr.f32.gmra.mrb[0].mxu0 %v1285
    %v1680 = vpop.f32.mrb[0].mxu0
    %v1681 = vadd.f32 %v1439, %v1680
    %v1682 = vpop.f32.mrb[0].mxu0
    %v1683 = vadd.f32 %v1439, %v1682
    %1684 = vmatprep.mubr.f32.mxu0 %v1288
    %1685 = vmatmul.mubr.f32.gmra.mrb[0].mxu0 %v1287
    %v1686 = vpop.f32.mrb[0].mxu0
    %v1687 = vadd.f32 %v1444, %v1686
    %v1688 = vpop.f32.mrb[0].mxu0
    %v1689 = vadd.f32 %v1444, %v1688
    %1690 = vmatprep.mubr.f32.mxu0 %v1290
    %1691 = vmatmul.mubr.f32.gmra.mrb[0].mxu0 %v1289
    %v1692 = vpop.f32.mrb[0].mxu0
    %v1693 = vadd.f32 %v1449, %v1692
    %v1694 = vpop.f32.mrb[0].mxu0
    %v1695 = vadd.f32 %v1449, %v1694
    %1696 = vmatprep.mubr.f32.mxu0 %v1292
    %1697 = vmatmul.mubr.f32.gmra.mrb[0].mxu0 %v1291
    %v1698 = vpop.f32.mrb[0].mxu0
    %v1699 = vadd.f32 %v1454, %v1698
    %v1700 = vpop.f32.mrb[0].mxu0
    %v1701 = vadd.f32 %v1454, %v1700
    %1702 = vmatprep.mubr.f32.mxu0 %v1294
    %1703 = vmatmul.mubr.f32.gmra.mrb[0].mxu0 %v1293
    %v1704 = vpop.f32.mrb[0].mxu0
    %v1705 = vadd.f32 %v1459, %v1704
    %v1706 = vpop.f32.mrb[0].mxu0
    %v1707 = vadd.f32 %v1459, %v1706
    %1708 = vmatprep.mubr.f32.mxu0 %v1296
    %1709 = vmatmul.mubr.f32.gmra.mrb[0].mxu0 %v1295
    %v1710 = vpop.f32.mrb[0].mxu0
    %v1711 = vadd.f32 %v1464, %v1710
    %v1712 = vpop.f32.mrb[0].mxu0
    %v1713 = vadd.f32 %v1464, %v1712
    %1714 = vmatprep.mubr.f32.mxu0 %v1298
    %1715 = vmatmul.mubr.f32.gmra.mrb[0].mxu0 %v1297
    %v1716 = vpop.f32.mrb[0].mxu0
    %v1717 = vadd.f32 %v1469, %v1716
    %v1718 = vpop.f32.mrb[0].mxu0
    %v1719 = vadd.f32 %v1469, %v1718
    %1720 = vmatprep.mubr.f32.mxu0 %v1300
    %1721 = vmatmul.mubr.f32.gmra.mrb[0].mxu0 %v1299
    %v1722 = vpop.f32.mrb[0].mxu0
    %v1723 = vadd.f32 %v1474, %v1722
    %v1724 = vpop.f32.mrb[0].mxu0
    %v1725 = vadd.f32 %v1474, %v1724
    %1726 = vmatprep.mubr.f32.mxu0 %v1302
    %1727 = vmatmul.mubr.f32.gmra.mrb[0].mxu0 %v1301
    %v1728 = vpop.f32.mrb[0].mxu0
    %v1729 = vadd.f32 %v1479, %v1728
    %v1730 = vpop.f32.mrb[0].mxu0
    %v1731 = vadd.f32 %v1479, %v1730
    %1732 = vmatprep.mubr.f32.mxu0 %v1304
    %1733 = vmatmul.mubr.f32.gmra.mrb[0].mxu0 %v1303
    %v1734 = vpop.f32.mrb[0].mxu0
    %v1735 = vadd.f32 %v1484, %v1734
    %v1736 = vpop.f32.mrb[0].mxu0
    %v1737 = vadd.f32 %v1484, %v1736
    %1738 = vmatprep.mubr.f32.mxu0 %v1306
    %1739 = vmatmul.mubr.f32.gmra.mrb[0].mxu0 %v1305
    %v1740 = vpop.f32.mrb[0].mxu0
    %v1741 = vadd.f32 %v1489, %v1740
    %v1742 = vpop.f32.mrb[0].mxu0
    %v1743 = vadd.f32 %v1489, %v1742
    %1744 = vmatprep.mubr.f32.mxu0 %v1308
    %1745 = vmatmul.mubr.f32.gmra.mrb[0].mxu0 %v1307
    %v1746 = vpop.f32.mrb[0].mxu0
    %v1747 = vadd.f32 %v1494, %v1746
    %v1748 = vpop.f32.mrb[0].mxu0
    %v1749 = vadd.f32 %v1494, %v1748
    %1750 = vmatprep.mubr.f32.mxu0 %v1310
    %1751 = vmatmul.mubr.f32.gmra.mrb[0].mxu0 %v1309
    %v1752 = vpop.f32.mrb[0].mxu0
    %v1753 = vadd.f32 %v1499, %v1752
    %v1754 = vpop.f32.mrb[0].mxu0
    %v1755 = vadd.f32 %v1499, %v1754
    %1756 = vmatprep.mubr.f32.mxu0 %v1312
    %1757 = vmatmul.mubr.f32.gmra.mrb[0].mxu0 %v1311
    %v1758 = vpop.f32.mrb[0].mxu0
    %v1759 = vadd.f32 %v1504, %v1758
    %v1760 = vpop.f32.mrb[0].mxu0
    %v1761 = vadd.f32 %v1504, %v1760
    %1762 = vdwg.mxu0
    %v1763 = vmax.f32 %v1573, 0.0
    %v1764 = vmax.f32 %v1575, 0.0
    %v1765 = vmax.f32 %v1579, 0.0
    %v1766 = vmax.f32 %v1581, 0.0
    %v1767 = vmax.f32 %v1585, 0.0
    %v1768 = vmax.f32 %v1587, 0.0
    %v1769 = vmax.f32 %v1591, 0.0
    %v1770 = vmax.f32 %v1593, 0.0
    %v1771 = vmax.f32 %v1597, 0.0
    %v1772 = vmax.f32 %v1599, 0.0
    %v1773 = vmax.f32 %v1603, 0.0
    %v1774 = vmax.f32 %v1605, 0.0
    %v1775 = vmax.f32 %v1609, 0.0
    %v1776 = vmax.f32 %v1611, 0.0
    %v1777 = vmax.f32 %v1615, 0.0
    %v1778 = vmax.f32 %v1617, 0.0
    %v1779 = vmax.f32 %v1621, 0.0
    %v1780 = vmax.f32 %v1623, 0.0
    %v1781 = vmax.f32 %v1627, 0.0
    %v1782 = vmax.f32 %v1629, 0.0
    %v1783 = vmax.f32 %v1633, 0.0
    %v1784 = vmax.f32 %v1635, 0.0
    %v1785 = vmax.f32 %v1639, 0.0
    %v1786 = vmax.f32 %v1641, 0.0
    %v1787 = vmax.f32 %v1645, 0.0
    %v1788 = vmax.f32 %v1647, 0.0
    %v1789 = vmax.f32 %v1651, 0.0
    %v1790 = vmax.f32 %v1653, 0.0
    %v1791 = vmax.f32 %v1657, 0.0
    %v1792 = vmax.f32 %v1659, 0.0
    %v1793 = vmax.f32 %v1663, 0.0
    %v1794 = vmax.f32 %v1665, 0.0
    %v1795 = vmax.f32 %v1669, 0.0
    %v1796 = vmax.f32 %v1671, 0.0
    %v1797 = vmax.f32 %v1675, 0.0
    %v1798 = vmax.f32 %v1677, 0.0
    %v1799 = vmax.f32 %v1681, 0.0
    %v1800 = vmax.f32 %v1683, 0.0
    %v1801 = vmax.f32 %v1687, 0.0
    %v1802 = vmax.f32 %v1689, 0.0
    %v1803 = vmax.f32 %v1693, 0.0
    %v1804 = vmax.f32 %v1695, 0.0
    %v1805 = vmax.f32 %v1699, 0.0
    %v1806 = vmax.f32 %v1701, 0.0
    %v1807 = vmax.f32 %v1705, 0.0
    %v1808 = vmax.f32 %v1707, 0.0
    %v1809 = vmax.f32 %v1711, 0.0
    %v1810 = vmax.f32 %v1713, 0.0
    %v1811 = vmax.f32 %v1717, 0.0
    %v1812 = vmax.f32 %v1719, 0.0
    %v1813 = vmax.f32 %v1723, 0.0
    %v1814 = vmax.f32 %v1725, 0.0
    %v1815 = vmax.f32 %v1729, 0.0
    %v1816 = vmax.f32 %v1731, 0.0
    %v1817 = vmax.f32 %v1735, 0.0
    %v1818 = vmax.f32 %v1737, 0.0
    %v1819 = vmax.f32 %v1741, 0.0
    %v1820 = vmax.f32 %v1743, 0.0
    %v1821 = vmax.f32 %v1747, 0.0
    %v1822 = vmax.f32 %v1749, 0.0
    %v1823 = vmax.f32 %v1753, 0.0
    %v1824 = vmax.f32 %v1755, 0.0
    %v1825 = vmax.f32 %v1759, 0.0
    %v1826 = vmax.f32 %v1761, 0.0
    %v1827 = vld [vmem:[%s5] sm:$0xff]
    %v1828 = vld [vmem:[%s5 + $0x8] sm:$0xff]
    %v1829 = vld [vmem:[%s6] sm:$0xff]
    %1831 = vset.pattern.permute.xlu0 0
    %1832 = vperm.xlu0 %1831, %v1829
    %v1833 = vpop.permute.xlu0 %1832
    %1835 = vmatprep.subr.mxu0 %v1764
    %1836 = vmatpush1.msra.mxu0 %v1763
    %1837 = vmatprep.subr.mxu0 %v1766
    %1838 = vmatpush1.msra.mxu0 %v1765
    %1839 = vmatprep.subr.mxu0 %v1768
    %1840 = vmatpush1.msra.mxu0 %v1767
    %1841 = vmatprep.subr.mxu0 %v1770
    %1842 = vmatpush1.msra.mxu0 %v1769
    %1843 = vmatprep.subr.mxu0 %v1772
    %1844 = vmatpush1.msra.mxu0 %v1771
    %1845 = vmatprep.subr.mxu0 %v1774
    %1846 = vmatpush1.msra.mxu0 %v1773
    %1847 = vmatprep.subr.mxu0 %v1776
    %1848 = vmatpush1.msra.mxu0 %v1775
    %1849 = vmatprep.subr.mxu0 %v1778
    %1850 = vmatpush1.msra.mxu0 %v1777
    %1851 = vmatprep.subr.mxu0 %v1780
    %1852 = vmatpush1.msra.mxu0 %v1779
    %1853 = vmatprep.subr.mxu0 %v1782
    %1854 = vmatpush1.msra.mxu0 %v1781
    %1855 = vmatprep.subr.mxu0 %v1784
    %1856 = vmatpush1.msra.mxu0 %v1783
    %1857 = vmatprep.subr.mxu0 %v1786
    %1858 = vmatpush1.msra.mxu0 %v1785
    %1859 = vmatprep.subr.mxu0 %v1788
    %1860 = vmatpush1.msra.mxu0 %v1787
    %1861 = vmatprep.subr.mxu0 %v1790
    %1862 = vmatpush1.msra.mxu0 %v1789
    %1863 = vmatprep.subr.mxu0 %v1792
    %1864 = vmatpush1.msra.mxu0 %v1791
    %1865 = vmatprep.subr.mxu0 %v1794
    %1866 = vmatpush1.msra.mxu0 %v1793
    %1867 = vmatprep.subr.mxu0 %v1796
    %1868 = vmatpush1.msra.mxu0 %v1795
    %1869 = vmatprep.subr.mxu0 %v1798
    %1870 = vmatpush1.msra.mxu0 %v1797
    %1871 = vmatprep.subr.mxu0 %v1800
    %1872 = vmatpush1.msra.mxu0 %v1799
    %1873 = vmatprep.subr.mxu0 %v1802
    %1874 = vmatpush1.msra.mxu0 %v1801
    %1875 = vmatprep.subr.mxu0 %v1804
    %1876 = vmatpush1.msra.mxu0 %v1803
    %1877 = vmatprep.subr.mxu0 %v1806
    %1878 = vmatpush1.msra.mxu0 %v1805
    %1879 = vmatprep.subr.mxu0 %v1808
    %1880 = vmatpush1.msra.mxu0 %v1807
    %1881 = vmatprep.subr.mxu0 %v1810
    %1882 = vmatpush1.msra.mxu0 %v1809
    %1883 = vmatprep.subr.mxu0 %v1812
    %1884 = vmatpush1.msra.mxu0 %v1811
    %1885 = vmatprep.subr.mxu0 %v1814
    %1886 = vmatpush1.msra.mxu0 %v1813
    %1887 = vmatprep.subr.mxu0 %v1816
    %1888 = vmatpush1.msra.mxu0 %v1815
    %1889 = vmatprep.subr.mxu0 %v1818
    %1890 = vmatpush1.msra.mxu0 %v1817
    %1891 = vmatprep.subr.mxu0 %v1820
    %1892 = vmatpush1.msra.mxu0 %v1819
    %1893 = vmatprep.subr.mxu0 %v1822
    %1894 = vmatpush1.msra.mxu0 %v1821
    %1895 = vmatprep.subr.mxu0 %v1824
    %1896 = vmatpush1.msra.mxu0 %v1823
    %1897 = vmatprep.subr.mxu0 %v1826
    %1898 = vmatpush1.msra.mxu0 %v1825
    %1899 = vmatprep.mubr.f32.mxu0 %v1828
    %1900 = vmatmul.mubr.f32.gmra.mrb[0].mxu0 %v1827
    %v1901 = vpop.f32.mrb[0].mxu0
    %v1902 = vadd.f32 %v1833, %v1901
    %v1903 = vpop.f32.mrb[0].mxu0
    %v1904 = vadd.f32 %v1833, %v1903
    %1905 = vdwg.mxu0
    %1906 = vst [vmem:[#allocation2] sm:$0xff] %v1902
    %1907 = vst [vmem:[#allocation2 + $0x8] sm:$0xff] %v1904
    // Predicated region
    $region30: #{tpu_custom_call.1} parent=1 // pred_check
      _
    $region31: #{tpu_custom_call.1} parent=1 // pred_check_branch
      %1909 = sbr.rel (0) target = $region33
    $region32: #{tpu_custom_call.1} parent=1 // pred_region
      %s1911 = ssub.s32 256, 256
      %1912 = vsyncadd [#allocation3], %s1911
      %s1914 = sshll.u32 [#allocation2], 4
      %s1915 = int_to_ptr.vmem [resolvable:$true] %s1914
      %1917 = dma.vmem_to_hbm [thread:$0]  %s1915, 256, %s7, [#allocation3]
    $region33: #{tpu_custom_call.1} parent=1 // pred_fallthru
      _
    // Predicated region
    $region34: #{tpu_custom_call.1} parent=1 // pred_check
      _
    $region35: #{tpu_custom_call.1} parent=1 // pred_check_branch
      %1919 = sbr.rel (0) target = $region37
    $region36: #{tpu_custom_call.1} parent=1 // pred_region
      %1920 = dma.done [#allocation3], 256
    $region37: #{tpu_custom_call.1} parent=1 // pred_fallthru
      _
    %1921 = vsyncpa [#allocation3], 1

</llo_original>
